<compile_context>
chip_gen: v6e
topology: v6e:2x2x1
jax: 0.10.0
libtpu: 0.0.40
codegen_flags: <defaults>
</compile_context>

<pallas_src>
import jax
import jax.numpy as jnp
from jax import lax
from jax.experimental import pallas as pl
from jax.experimental.pallas import tpu as pltpu

# ---- "Phi3Config" (synthetic, small) ----
HIDDEN_SIZE = 64
NUM_HEADS = 4
NUM_KV_HEADS = 2
HEAD_DIM = HIDDEN_SIZE // NUM_HEADS            # 16
NUM_KV_GROUPS = NUM_HEADS // NUM_KV_HEADS      # 2
SCALING = HEAD_DIM ** (-0.5)                   # 0.25 (exact power of two)
ROPE_THETA = 10000.0

BATCH = 2
SEQ = 8

Q_COLS = NUM_HEADS * HEAD_DIM                  # 64
K_COLS = NUM_KV_HEADS * HEAD_DIM               # 32
V_COLS = NUM_KV_HEADS * HEAD_DIM               # 32
OP_SIZE = Q_COLS + K_COLS + V_COLS             # 128


def phi3_attn_kernel(x_ref, cos_ref, sin_ref, wqkv_ref, wo_ref, out_ref):
    """One batch element per grid step.

    x:    (S, H)           compute dtype (activations)
    cos:  (S, D) f32       sin: (S, D) f32
    wqkv: (H, OP_SIZE)     compute dtype; q columns pre-scaled by head_dim**-0.5
    wo:   (Q_COLS, O_PAD)  compute dtype (o_proj^T, zero-padded to a lane multiple)
    out:  (S, O_PAD) f32
    """
    s = x_ref.shape[0]
    d = HEAD_DIM
    half = d // 2
    g = NUM_KV_GROUPS
    cdt = wqkv_ref.dtype                       # MXU operand dtype (f32 or bf16)

    # Fused qkv projection: one MXU matmul, f32 accumulation.
    proj = jnp.dot(x_ref[...], wqkv_ref[...], preferred_element_type=jnp.float32)

    cos = cos_ref[...]
    sin = sin_ref[...]

    def rope(xh):
        # rotate_half via two half slices (portable to interpret mode); on HW
        # prefer pltpu.roll(xh, half, axis=1) * (+/-1 sign vector) -> XLU slot.
        xh_rot = jnp.concatenate([-xh[:, half:], xh[:, :half]], axis=1)
        return xh * cos + xh_rot * sin

    # Causal mask for the group-stacked (G*S, S) score matrix.
    q_pos = lax.broadcasted_iota(jnp.int32, (g * s, s), 0) % s
    k_pos = lax.broadcasted_iota(jnp.int32, (g * s, s), 1)
    causal = k_pos <= q_pos
    neg = jnp.float32(-1e30)

    out_acc = jnp.zeros(out_ref.shape, jnp.float32)

    for kh in range(NUM_KV_HEADS):
        k_emb = rope(proj[:, Q_COLS + kh * d: Q_COLS + (kh + 1) * d])            # (S, D)
        v_h = proj[:, Q_COLS + K_COLS + kh * d: Q_COLS + K_COLS + (kh + 1) * d]  # (S, D)

        # Stack this KV head's G query heads along rows -> one score matmul and
        # one PV matmul per KV head.
        q_grp = jnp.concatenate(
            [rope(proj[:, (kh * g + j) * d: (kh * g + j + 1) * d]) for j in range(g)],
            axis=0)                                                              # (G*S, D)

        sc = lax.dot_general(q_grp.astype(cdt), k_emb.astype(cdt),
                             (((1,), (1,)), ((), ())),
                             preferred_element_type=jnp.float32)                 # (G*S, S)
        sc = jnp.where(causal, sc, neg)
        m = jnp.max(sc, axis=-1, keepdims=True)
        p = jnp.exp(sc - m)                                                      # f32
        l = jnp.sum(p, axis=-1, keepdims=True)
        o = jnp.dot(p.astype(cdt), v_h.astype(cdt),
                    preferred_element_type=jnp.float32)                          # (G*S, D)
        o = o / l                                                                # exact normalize

        # Fold o_proj into the loop: per query head, multiply by the matching
        # HEAD_DIM rows of wo^T and accumulate into the full-width slab.
        for j in range(g):
            h = kh * g + j
            out_acc = out_acc + jnp.dot(
                o[j * s:(j + 1) * s, :].astype(cdt),
                wo_ref[h * d:(h + 1) * d, :],
                preferred_element_type=jnp.float32)

    out_ref[...] = out_acc


def phi3_attention_pallas(hidden_states, cos, sin, wqkv, wo,
                          *, compute_dtype=jnp.float32):
    """Forward pass of Phi3Attention (eager, causal, no KV cache / dropout)."""
    B, S, H = hidden_states.shape
    rows = B * S

    # Lane-dense output width; no padding when H is already a lane multiple
    # (e.g. H=3072 for real Phi3).
    o_pad = H if H % 128 == 0 else pl.cdiv(H, 128) * 128

    # ---- one-time wrapper prep (layout plumbing; no hot-loop compute) ----
    x2d = hidden_states.reshape(rows, H).astype(compute_dtype)

    wt = wqkv.T.astype(jnp.float32)                       # (H, OP_SIZE) = [q | k | v]
    wq = wt[:, :Q_COLS] * jnp.float32(SCALING)            # fold attention scaling (exact)
    wqkv_t = jnp.concatenate([wq, wt[:, Q_COLS:]], axis=1).astype(compute_dtype)

    wo_t = wo.T.astype(jnp.float32)                       # (Q_COLS, H)
    wo_pad = jnp.pad(wo_t, ((0, 0), (0, o_pad - H))).astype(compute_dtype)

    cos2d = cos.reshape(rows, HEAD_DIM).astype(jnp.float32)
    sin2d = sin.reshape(rows, HEAD_DIM).astype(jnp.float32)

    out = pl.pallas_call(
        phi3_attn_kernel,
        out_shape=jax.ShapeDtypeStruct((rows, o_pad), jnp.float32),
        grid_spec=pltpu.PrefetchScalarGridSpec(
            num_scalar_prefetch=0,
            grid=(B,),                                    # size-2 "parallel" axis (v7x: both TCs)
            in_specs=[
                pl.BlockSpec((S, H), lambda b: (b, 0)),
                pl.BlockSpec((S, HEAD_DIM), lambda b: (b, 0)),
                pl.BlockSpec((S, HEAD_DIM), lambda b: (b, 0)),
                pl.BlockSpec((H, OP_SIZE), lambda b: (0, 0)),
                pl.BlockSpec((Q_COLS, o_pad), lambda b: (0, 0)),
            ],
            out_specs=pl.BlockSpec((S, o_pad), lambda b: (b, 0)),
        ),
        compiler_params=pltpu.CompilerParams(
            dimension_semantics=("parallel",)),
    )(x2d, cos2d, sin2d, wqkv_t, wo_pad)

    return out[:, :H].reshape(B, S, H)


# ---------- pure-JAX reference (mirrors the PyTorch eager semantics) ----------
def _rotate_half(x):
    half = x.shape[-1] // 2
    return jnp.concatenate([-x[..., half:], x[..., :half]], axis=-1)


def phi3_attention_ref(hidden_states, cos, sin, wqkv, wo):
    B, S, H = hidden_states.shape
    hp = 'highest'  # f32-accurate matmuls so the comparison is not MXU-default noise
    qkv = jnp.einsum('bsh,oh->bso', hidden_states, wqkv, precision=hp)
    q_pos = NUM_HEADS * HEAD_DIM
    kv_pos = q_pos + NUM_KV_HEADS * HEAD_DIM
    q = qkv[..., :q_pos].reshape(B, S, NUM_HEADS, HEAD_DIM).transpose(0, 2, 1, 3)
    k = qkv[..., q_pos:kv_pos].reshape(B, S, NUM_KV_HEADS, HEAD_DIM).transpose(0, 2, 1, 3)
    v = qkv[..., kv_pos:].reshape(B, S, NUM_KV_HEADS, HEAD_DIM).transpose(0, 2, 1, 3)

    c = cos[:, None, :, :]
    s = sin[:, None, :, :]
    q = q * c + _rotate_half(q) * s
    k = k * c + _rotate_half(k) * s

    k = jnp.repeat(k, NUM_KV_GROUPS, axis=1)
    v = jnp.repeat(v, NUM_KV_GROUPS, axis=1)

    scores = jnp.einsum('bhqd,bhkd->bhqk', q, k, precision=hp) * SCALING
    causal = jnp.tril(jnp.ones((S, S), dtype=bool))
    scores = jnp.where(causal[None, None], scores, -jnp.inf)
    p = jax.nn.softmax(scores, axis=-1)
    o = jnp.einsum('bhqk,bhkd->bhqd', p, v, precision=hp)
    o = o.transpose(0, 2, 1, 3).reshape(B, S, NUM_HEADS * HEAD_DIM)
    return jnp.einsum('bsd,hd->bsh', o, wo, precision=hp)


def make_rope(B, S, D, dtype=jnp.float32):
    inv_freq = 1.0 / (ROPE_THETA ** (jnp.arange(0, D, 2, dtype=jnp.float32) / D))
    pos = jnp.arange(S, dtype=jnp.float32)
    freqs = jnp.outer(pos, inv_freq)                 # (S, D/2)
    emb = jnp.concatenate([freqs, freqs], axis=-1)   # (S, D)
    cos = jnp.broadcast_to(jnp.cos(emb), (B, S, D)).astype(dtype)
    sin = jnp.broadcast_to(jnp.sin(emb), (B, S, D)).astype(dtype)
    return cos, sin


if __name__ == "__main__":
    key = jax.random.PRNGKey(0)
    k_hs, k_qkv, k_o = jax.random.split(key, 3)

    hidden_states = jax.random.normal(k_hs, (BATCH, SEQ, HIDDEN_SIZE), jnp.float32)
    wqkv = jax.random.normal(k_qkv, (OP_SIZE, HIDDEN_SIZE), jnp.float32) * (HIDDEN_SIZE ** -0.5)
    wo = jax.random.normal(k_o, (HIDDEN_SIZE, NUM_HEADS * HEAD_DIM), jnp.float32) * ((NUM_HEADS * HEAD_DIM) ** -0.5)
    cos, sin = make_rope(BATCH, SEQ, HEAD_DIM)

    ref = phi3_attention_ref(hidden_states, cos, sin, wqkv, wo)

    # f32 MXU operands: strict numerical check (tolerance leaves headroom for
    # MXU default-precision f32 matmuls; typical max error is ~1e-5).
    out_f32 = jax.block_until_ready(
        phi3_attention_pallas(hidden_states, cos, sin, wqkv, wo,
                              compute_dtype=jnp.float32))
    assert out_f32.shape == (BATCH, SEQ, HIDDEN_SIZE)
    err_f32 = float(jnp.max(jnp.abs(out_f32 - ref)))
    assert jnp.allclose(out_f32, ref, atol=2e-2, rtol=2e-2), (
        f"f32 kernel mismatch vs reference (max abs err {err_f32:.3e})")

    # bf16 MXU operands + f32 accumulation: production configuration.  The
    # looser tolerance purely reflects bf16 operand rounding vs the f32 reference.
    out_bf16 = jax.block_until_ready(
        phi3_attention_pallas(hidden_states, cos, sin, wqkv, wo,
                              compute_dtype=jnp.bfloat16))
    err_bf16 = float(jnp.max(jnp.abs(out_bf16 - ref)))
    assert jnp.allclose(out_bf16, ref, atol=1.5e-1, rtol=1.5e-1), (
        f"bf16 kernel mismatch vs reference (max abs err {err_bf16:.3e})")

    # TODO(synk): past_key_value cache update, attention dropout (training),
    # sliding-window masking, and returning attn_weights are not modeled;
    # eager causal inference path only.
    print("KERNEL_OK")
</pallas_src>

<mosaic_0001>
module attributes {stable_mosaic.version = 11 : i64} {
  func.func @phi3_attn_kernel(%arg0: i32, %arg1: memref<8x64xf32, #tpu.memory_space<vmem>>, %arg2: memref<8x16xf32, #tpu.memory_space<vmem>>, %arg3: memref<8x16xf32, #tpu.memory_space<vmem>>, %arg4: memref<64x128xf32, #tpu.memory_space<vmem>>, %arg5: memref<64x128xf32, #tpu.memory_space<vmem>>, %arg6: memref<8x128xf32, #tpu.memory_space<vmem>>) attributes {dimension_semantics = [#tpu.dimension_semantics<parallel>], iteration_bounds = array<i64: 2>, scalar_prefetch = 0 : i64, scratch_operands = 0 : i64, tpu.core_type = #tpu.core_type<tc>, window_params = [{transform_indices = @transform_0, window_bounds = array<i64: 8, 64>}, {transform_indices = @transform_1, window_bounds = array<i64: 8, 16>}, {transform_indices = @transform_2, window_bounds = array<i64: 8, 16>}, {pipeline_mode = #tpu.pipeline_mode<synchronous>, transform_indices = @transform_3, window_bounds = array<i64: 64, 128>}, {pipeline_mode = #tpu.pipeline_mode<synchronous>, transform_indices = @transform_4, window_bounds = array<i64: 64, 128>}, {transform_indices = @transform_5, window_bounds = array<i64: 8, 128>}]} {
    %c0 = arith.constant 0 : index
    %c0_0 = arith.constant 0 : index
    %0 = vector.load %arg1[%c0, %c0_0] : memref<8x64xf32, #tpu.memory_space<vmem>>, vector<8x64xf32>
    %c0_1 = arith.constant 0 : index
    %c0_2 = arith.constant 0 : index
    %1 = vector.load %arg4[%c0_1, %c0_2] : memref<64x128xf32, #tpu.memory_space<vmem>>, vector<64x128xf32>
    %cst = arith.constant dense<0.000000e+00> : vector<8x128xf32>
    %2 = tpu.matmul %0, %1, %cst {dimension_numbers = #tpu.dot_dimension_numbers<[1], [0], [0], [1], [0, 0, 1, 1], [], []>} : vector<8x64xf32>, vector<64x128xf32>, vector<8x128xf32> -> vector<8x128xf32>
    %c0_3 = arith.constant 0 : index
    %c0_4 = arith.constant 0 : index
    %3 = vector.load %arg2[%c0_3, %c0_4] : memref<8x16xf32, #tpu.memory_space<vmem>>, vector<8x16xf32>
    %c0_5 = arith.constant 0 : index
    %c0_6 = arith.constant 0 : index
    %4 = vector.load %arg3[%c0_5, %c0_6] : memref<8x16xf32, #tpu.memory_space<vmem>>, vector<8x16xf32>
    %5 = tpu.iota {dimensions = array<i32: 0>} : vector<16x8xi32>
    %c8_i32 = arith.constant 8 : i32
    %c0_i32 = arith.constant 0 : i32
    %6 = arith.cmpi eq, %c8_i32, %c0_i32 : i32
    %c1_i32 = arith.constant 1 : i32
    %7 = arith.select %6, %c1_i32, %c8_i32 : i32
    %8 = vector.broadcast %7 : i32 to vector<16x8xi32>
    %9 = arith.remsi %5, %8 : vector<16x8xi32>
    %c0_i32_7 = arith.constant 0 : i32
    %10 = vector.broadcast %c0_i32_7 : i32 to vector<16x8xi32>
    %11 = arith.cmpi ne, %9, %10 : vector<16x8xi32>
    %c0_i32_8 = arith.constant 0 : i32
    %12 = vector.broadcast %c0_i32_8 : i32 to vector<16x8xi32>
    %13 = arith.cmpi slt, %9, %12 : vector<16x8xi32>
    %c0_i32_9 = arith.constant 0 : i32
    %14 = arith.cmpi slt, %7, %c0_i32_9 : i32
    %15 = vector.broadcast %14 : i1 to vector<16x8xi1>
    %16 = vector.broadcast %15 : vector<16x8xi1> to vector<16x8xi1>
    %17 = arith.xori %13, %16 : vector<16x8xi1>
    %18 = arith.andi %17, %11 : vector<16x8xi1>
    %19 = vector.broadcast %7 : i32 to vector<16x8xi32>
    %20 = arith.addi %9, %19 : vector<16x8xi32>
    %21 = arith.select %18, %20, %9 : vector<16x8xi1>, vector<16x8xi32>
    %22 = tpu.iota {dimensions = array<i32: 1>} : vector<16x8xi32>
    %23 = arith.cmpi sle, %22, %21 : vector<16x8xi32>
    %cst_10 = arith.constant 0.000000e+00 : f32
    %24 = vector.broadcast %cst_10 : f32 to vector<8x128xf32>
    %25 = vector.extract_strided_slice %2 {offsets = [0, 64], sizes = [8, 16], strides = [1, 1]} : vector<8x128xf32> to vector<8x16xf32>
    %26 = vector.extract_strided_slice %25 {offsets = [0, 8], sizes = [8, 8], strides = [1, 1]} : vector<8x16xf32> to vector<8x8xf32>
    %cst_11 = arith.constant 0.000000e+00 : f32
    %27 = vector.broadcast %cst_11 : f32 to vector<8x8xf32>
    %28 = arith.subf %27, %26 : vector<8x8xf32>
    %29 = vector.extract_strided_slice %25 {offsets = [0, 0], sizes = [8, 8], strides = [1, 1]} : vector<8x16xf32> to vector<8x8xf32>
    %30 = tpu.concatenate %28, %29 in 1 : vector<8x8xf32>, vector<8x8xf32> -> vector<8x16xf32>
    %31 = arith.mulf %25, %3 : vector<8x16xf32>
    %32 = arith.mulf %30, %4 : vector<8x16xf32>
    %33 = arith.addf %31, %32 : vector<8x16xf32>
    %34 = vector.extract_strided_slice %2 {offsets = [0, 96], sizes = [8, 16], strides = [1, 1]} : vector<8x128xf32> to vector<8x16xf32>
    %35 = vector.extract_strided_slice %2 {offsets = [0, 0], sizes = [8, 16], strides = [1, 1]} : vector<8x128xf32> to vector<8x16xf32>
    %36 = vector.extract_strided_slice %35 {offsets = [0, 8], sizes = [8, 8], strides = [1, 1]} : vector<8x16xf32> to vector<8x8xf32>
    %cst_12 = arith.constant 0.000000e+00 : f32
    %37 = vector.broadcast %cst_12 : f32 to vector<8x8xf32>
    %38 = arith.subf %37, %36 : vector<8x8xf32>
    %39 = vector.extract_strided_slice %35 {offsets = [0, 0], sizes = [8, 8], strides = [1, 1]} : vector<8x16xf32> to vector<8x8xf32>
    %40 = tpu.concatenate %38, %39 in 1 : vector<8x8xf32>, vector<8x8xf32> -> vector<8x16xf32>
    %41 = arith.mulf %35, %3 : vector<8x16xf32>
    %42 = arith.mulf %40, %4 : vector<8x16xf32>
    %43 = arith.addf %41, %42 : vector<8x16xf32>
    %44 = vector.extract_strided_slice %2 {offsets = [0, 16], sizes = [8, 16], strides = [1, 1]} : vector<8x128xf32> to vector<8x16xf32>
    %45 = vector.extract_strided_slice %44 {offsets = [0, 8], sizes = [8, 8], strides = [1, 1]} : vector<8x16xf32> to vector<8x8xf32>
    %cst_13 = arith.constant 0.000000e+00 : f32
    %46 = vector.broadcast %cst_13 : f32 to vector<8x8xf32>
    %47 = arith.subf %46, %45 : vector<8x8xf32>
    %48 = vector.extract_strided_slice %44 {offsets = [0, 0], sizes = [8, 8], strides = [1, 1]} : vector<8x16xf32> to vector<8x8xf32>
    %49 = tpu.concatenate %47, %48 in 1 : vector<8x8xf32>, vector<8x8xf32> -> vector<8x16xf32>
    %50 = arith.mulf %44, %3 : vector<8x16xf32>
    %51 = arith.mulf %49, %4 : vector<8x16xf32>
    %52 = arith.addf %50, %51 : vector<8x16xf32>
    %53 = tpu.concatenate %43, %52 in 0 : vector<8x16xf32>, vector<8x16xf32> -> vector<16x16xf32>
    %cst_14 = arith.constant dense<0.000000e+00> : vector<16x8xf32>
    %54 = tpu.matmul %53, %33, %cst_14 {dimension_numbers = #tpu.dot_dimension_numbers<[1], [1], [0], [0], [0, 0, 1, 0], [], []>} : vector<16x16xf32>, vector<8x16xf32>, vector<16x8xf32> -> vector<16x8xf32>
    %cst_15 = arith.constant -1.000000e+30 : f32
    %55 = vector.broadcast %cst_15 : f32 to vector<16x8xf32>
    %56 = arith.select %23, %54, %55 : vector<16x8xi1>, vector<16x8xf32>
    %cst_16 = arith.constant dense<0xFF800000> : vector<16xf32>
    %57 = vector.multi_reduction <maximumf>, %56, %cst_16 [1] : vector<16x8xf32> to vector<16xf32>
    %58 = vector.shape_cast %57 : vector<16xf32> to vector<16x1xf32>
    %59 = vector.broadcast %58 : vector<16x1xf32> to vector<16x8xf32>
    %60 = arith.subf %56, %59 : vector<16x8xf32>
    %61 = math.exp %60 : vector<16x8xf32>
    %cst_17 = arith.constant dense<0.000000e+00> : vector<16xf32>
    %62 = vector.multi_reduction <add>, %61, %cst_17 [1] : vector<16x8xf32> to vector<16xf32>
    %63 = vector.shape_cast %62 : vector<16xf32> to vector<16x1xf32>
    %cst_18 = arith.constant dense<0.000000e+00> : vector<16x16xf32>
    %64 = tpu.matmul %61, %34, %cst_18 {dimension_numbers = #tpu.dot_dimension_numbers<[1], [0], [0], [1], [0, 0, 1, 1], [], []>} : vector<16x8xf32>, vector<8x16xf32>, vector<16x16xf32> -> vector<16x16xf32>
    %65 = vector.broadcast %63 : vector<16x1xf32> to vector<16x16xf32>
    %66 = arith.divf %64, %65 : vector<16x16xf32>
    %67 = vector.extract_strided_slice %66 {offsets = [0, 0], sizes = [8, 16], strides = [1, 1]} : vector<16x16xf32> to vector<8x16xf32>
    %c0_19 = arith.constant 0 : index
    %c0_20 = arith.constant 0 : index
    %68 = vector.load %arg5[%c0_19, %c0_20] : memref<64x128xf32, #tpu.memory_space<vmem>>, vector<16x128xf32>
    %cst_21 = arith.constant dense<0.000000e+00> : vector<8x128xf32>
    %69 = tpu.matmul %67, %68, %cst_21 {dimension_numbers = #tpu.dot_dimension_numbers<[1], [0], [0], [1], [0, 0, 1, 1], [], []>} : vector<8x16xf32>, vector<16x128xf32>, vector<8x128xf32> -> vector<8x128xf32>
    %70 = arith.addf %24, %69 : vector<8x128xf32>
    %71 = vector.extract_strided_slice %66 {offsets = [8, 0], sizes = [8, 16], strides = [1, 1]} : vector<16x16xf32> to vector<8x16xf32>
    %c16 = arith.constant 16 : index
    %c0_22 = arith.constant 0 : index
    %72 = vector.load %arg5[%c16, %c0_22] : memref<64x128xf32, #tpu.memory_space<vmem>>, vector<16x128xf32>
    %cst_23 = arith.constant dense<0.000000e+00> : vector<8x128xf32>
    %73 = tpu.matmul %71, %72, %cst_23 {dimension_numbers = #tpu.dot_dimension_numbers<[1], [0], [0], [1], [0, 0, 1, 1], [], []>} : vector<8x16xf32>, vector<16x128xf32>, vector<8x128xf32> -> vector<8x128xf32>
    %74 = arith.addf %70, %73 : vector<8x128xf32>
    %75 = vector.extract_strided_slice %2 {offsets = [0, 80], sizes = [8, 16], strides = [1, 1]} : vector<8x128xf32> to vector<8x16xf32>
    %76 = vector.extract_strided_slice %75 {offsets = [0, 8], sizes = [8, 8], strides = [1, 1]} : vector<8x16xf32> to vector<8x8xf32>
    %cst_24 = arith.constant 0.000000e+00 : f32
    %77 = vector.broadcast %cst_24 : f32 to vector<8x8xf32>
    %78 = arith.subf %77, %76 : vector<8x8xf32>
    %79 = vector.extract_strided_slice %75 {offsets = [0, 0], sizes = [8, 8], strides = [1, 1]} : vector<8x16xf32> to vector<8x8xf32>
    %80 = tpu.concatenate %78, %79 in 1 : vector<8x8xf32>, vector<8x8xf32> -> vector<8x16xf32>
    %81 = arith.mulf %75, %3 : vector<8x16xf32>
    %82 = arith.mulf %80, %4 : vector<8x16xf32>
    %83 = arith.addf %81, %82 : vector<8x16xf32>
    %84 = vector.extract_strided_slice %2 {offsets = [0, 112], sizes = [8, 16], strides = [1, 1]} : vector<8x128xf32> to vector<8x16xf32>
    %85 = vector.extract_strided_slice %2 {offsets = [0, 32], sizes = [8, 16], strides = [1, 1]} : vector<8x128xf32> to vector<8x16xf32>
    %86 = vector.extract_strided_slice %85 {offsets = [0, 8], sizes = [8, 8], strides = [1, 1]} : vector<8x16xf32> to vector<8x8xf32>
    %cst_25 = arith.constant 0.000000e+00 : f32
    %87 = vector.broadcast %cst_25 : f32 to vector<8x8xf32>
    %88 = arith.subf %87, %86 : vector<8x8xf32>
    %89 = vector.extract_strided_slice %85 {offsets = [0, 0], sizes = [8, 8], strides = [1, 1]} : vector<8x16xf32> to vector<8x8xf32>
    %90 = tpu.concatenate %88, %89 in 1 : vector<8x8xf32>, vector<8x8xf32> -> vector<8x16xf32>
    %91 = arith.mulf %85, %3 : vector<8x16xf32>
    %92 = arith.mulf %90, %4 : vector<8x16xf32>
    %93 = arith.addf %91, %92 : vector<8x16xf32>
    %94 = vector.extract_strided_slice %2 {offsets = [0, 48], sizes = [8, 16], strides = [1, 1]} : vector<8x128xf32> to vector<8x16xf32>
    %95 = vector.extract_strided_slice %94 {offsets = [0, 8], sizes = [8, 8], strides = [1, 1]} : vector<8x16xf32> to vector<8x8xf32>
    %cst_26 = arith.constant 0.000000e+00 : f32
    %96 = vector.broadcast %cst_26 : f32 to vector<8x8xf32>
    %97 = arith.subf %96, %95 : vector<8x8xf32>
    %98 = vector.extract_strided_slice %94 {offsets = [0, 0], sizes = [8, 8], strides = [1, 1]} : vector<8x16xf32> to vector<8x8xf32>
    %99 = tpu.concatenate %97, %98 in 1 : vector<8x8xf32>, vector<8x8xf32> -> vector<8x16xf32>
    %100 = arith.mulf %94, %3 : vector<8x16xf32>
    %101 = arith.mulf %99, %4 : vector<8x16xf32>
    %102 = arith.addf %100, %101 : vector<8x16xf32>
    %103 = tpu.concatenate %93, %102 in 0 : vector<8x16xf32>, vector<8x16xf32> -> vector<16x16xf32>
    %cst_27 = arith.constant dense<0.000000e+00> : vector<16x8xf32>
    %104 = tpu.matmul %103, %83, %cst_27 {dimension_numbers = #tpu.dot_dimension_numbers<[1], [1], [0], [0], [0, 0, 1, 0], [], []>} : vector<16x16xf32>, vector<8x16xf32>, vector<16x8xf32> -> vector<16x8xf32>
    %cst_28 = arith.constant -1.000000e+30 : f32
    %105 = vector.broadcast %cst_28 : f32 to vector<16x8xf32>
    %106 = arith.select %23, %104, %105 : vector<16x8xi1>, vector<16x8xf32>
    %cst_29 = arith.constant dense<0xFF800000> : vector<16xf32>
    %107 = vector.multi_reduction <maximumf>, %106, %cst_29 [1] : vector<16x8xf32> to vector<16xf32>
    %108 = vector.shape_cast %107 : vector<16xf32> to vector<16x1xf32>
    %109 = vector.broadcast %108 : vector<16x1xf32> to vector<16x8xf32>
    %110 = arith.subf %106, %109 : vector<16x8xf32>
    %111 = math.exp %110 : vector<16x8xf32>
    %cst_30 = arith.constant dense<0.000000e+00> : vector<16xf32>
    %112 = vector.multi_reduction <add>, %111, %cst_30 [1] : vector<16x8xf32> to vector<16xf32>
    %113 = vector.shape_cast %112 : vector<16xf32> to vector<16x1xf32>
    %cst_31 = arith.constant dense<0.000000e+00> : vector<16x16xf32>
    %114 = tpu.matmul %111, %84, %cst_31 {dimension_numbers = #tpu.dot_dimension_numbers<[1], [0], [0], [1], [0, 0, 1, 1], [], []>} : vector<16x8xf32>, vector<8x16xf32>, vector<16x16xf32> -> vector<16x16xf32>
    %115 = vector.broadcast %113 : vector<16x1xf32> to vector<16x16xf32>
    %116 = arith.divf %114, %115 : vector<16x16xf32>
    %117 = vector.extract_strided_slice %116 {offsets = [0, 0], sizes = [8, 16], strides = [1, 1]} : vector<16x16xf32> to vector<8x16xf32>
    %c32 = arith.constant 32 : index
    %c0_32 = arith.constant 0 : index
    %118 = vector.load %arg5[%c32, %c0_32] : memref<64x128xf32, #tpu.memory_space<vmem>>, vector<16x128xf32>
    %cst_33 = arith.constant dense<0.000000e+00> : vector<8x128xf32>
    %119 = tpu.matmul %117, %118, %cst_33 {dimension_numbers = #tpu.dot_dimension_numbers<[1], [0], [0], [1], [0, 0, 1, 1], [], []>} : vector<8x16xf32>, vector<16x128xf32>, vector<8x128xf32> -> vector<8x128xf32>
    %120 = arith.addf %74, %119 : vector<8x128xf32>
    %121 = vector.extract_strided_slice %116 {offsets = [8, 0], sizes = [8, 16], strides = [1, 1]} : vector<16x16xf32> to vector<8x16xf32>
    %c48 = arith.constant 48 : index
    %c0_34 = arith.constant 0 : index
    %122 = vector.load %arg5[%c48, %c0_34] : memref<64x128xf32, #tpu.memory_space<vmem>>, vector<16x128xf32>
    %cst_35 = arith.constant dense<0.000000e+00> : vector<8x128xf32>
    %123 = tpu.matmul %121, %122, %cst_35 {dimension_numbers = #tpu.dot_dimension_numbers<[1], [0], [0], [1], [0, 0, 1, 1], [], []>} : vector<8x16xf32>, vector<16x128xf32>, vector<8x128xf32> -> vector<8x128xf32>
    %124 = arith.addf %120, %123 : vector<8x128xf32>
    %c0_36 = arith.constant 0 : index
    %c0_37 = arith.constant 0 : index
    %125 = vector.load %arg6[%c0_36, %c0_37] : memref<8x128xf32, #tpu.memory_space<vmem>>, vector<8x128xf32>
    tpu.vector_store %arg6[%c0_36, %c0_37], %124 {strides = array<i32>} : memref<8x128xf32, #tpu.memory_space<vmem>>, vector<8x128xf32>,
    return
  }
  func.func @transform_0(%arg0: i32) -> (i32, i32) {
    %c0_i32 = arith.constant 0 : i32
    %c0_i32_0 = arith.constant 0 : i32
    return %arg0, %c0_i32 : i32, i32
  }
  func.func @transform_1(%arg0: i32) -> (i32, i32) {
    %c0_i32 = arith.constant 0 : i32
    %c0_i32_0 = arith.constant 0 : i32
    return %arg0, %c0_i32 : i32, i32
  }
  func.func @transform_2(%arg0: i32) -> (i32, i32) {
    %c0_i32 = arith.constant 0 : i32
    %c0_i32_0 = arith.constant 0 : i32
    return %arg0, %c0_i32 : i32, i32
  }
  func.func @transform_3(%arg0: i32) -> (i32, i32) {
    %c0_i32 = arith.constant 0 : i32
    %c0_i32_0 = arith.constant 0 : i32
    %c0_i32_1 = arith.constant 0 : i32
    return %c0_i32, %c0_i32_0 : i32, i32
  }
  func.func @transform_4(%arg0: i32) -> (i32, i32) {
    %c0_i32 = arith.constant 0 : i32
    %c0_i32_0 = arith.constant 0 : i32
    %c0_i32_1 = arith.constant 0 : i32
    return %c0_i32, %c0_i32_0 : i32, i32
  }
  func.func @transform_5(%arg0: i32) -> (i32, i32) {
    %c0_i32 = arith.constant 0 : i32
    %c0_i32_0 = arith.constant 0 : i32
    return %arg0, %c0_i32 : i32, i32
  }
}

</mosaic_0001>

<llo_original>
// kernel: tpu_custom_call.1
$region0: #{tpu_custom_call.1}
  #allocation0 [shape = 'u32[]', space=smem, size = 0x4, offset = 0x4, fixed_abs, tag = 'smem constant byte address 0x4 - core index']
  #allocation1 [shape = 'u32[144,128]{1,0:T(1,128)}', space=vmem, size = 0x12000, scoped, tag = 'internal scratch']
  %s0 = inlined_call_operand.hbm [shape: f32[16,64], index: 0, kind: input, shape index: {}]
  %s1 = inlined_call_operand.hbm [shape: f32[16,16], index: 1, kind: input, shape index: {}]
  %s2 = inlined_call_operand.hbm [shape: f32[16,16], index: 2, kind: input, shape index: {}]
  %s3 = inlined_call_operand.hbm [shape: f32[64,128], index: 3, kind: input, shape index: {}]
  %s4 = inlined_call_operand.hbm [shape: f32[64,128], index: 4, kind: input, shape index: {}]
  %s5 = inlined_call_operand.hbm [shape: f32[16,128], index: 5, kind: output, shape index: {}]
  %s6 = sld [smem:[#allocation0]]
  $region73: #{tpu_custom_call.1} parent=0
    _
  %s8 = ssub.s32 1, %s6
  %s9 = scalar_select 0, %s8, %s6
  $region1: #{tpu_custom_call.1} parent=0
    #allocation2 [shape = 'u8[8192]{0}', space=vmem, size = 0x2000, scoped, tag = 'input window, operand 0']
    #allocation3 [shape = 's32[2]{0}', space=sflag, size = 0x8, scoped, tag = 'scoped memory for tpu_custom_call.1']
    #allocation4 [shape = 's32[2]{0}', space=sflag, size = 0x8, scoped, tag = 'scoped memory for tpu_custom_call.1']
    #allocation5 [shape = 'u8[8192]{0}', space=vmem, size = 0x2000, scoped, tag = 'input window, operand 1']
    #allocation6 [shape = 's32[2]{0}', space=sflag, size = 0x8, scoped, tag = 'scoped memory for tpu_custom_call.1']
    #allocation7 [shape = 'u8[8192]{0}', space=vmem, size = 0x2000, scoped, tag = 'input window, operand 2']
    #allocation8 [shape = 'u8[32768]{0}', space=vmem, size = 0x8000, scoped, tag = 'input window, operand 3, single buffered']
    #allocation9 [shape = 's32[1]{0}', space=sflag, size = 0x4, scoped, tag = 'scoped memory for tpu_custom_call.1']
    #allocation10 [shape = 'u8[32768]{0}', space=vmem, size = 0x8000, scoped, tag = 'input window, operand 4, single buffered']
    #allocation11 [shape = 'u8[8192]{0}', space=vmem, size = 0x2000, scoped, tag = 'output window, operand 0']
    %10 = vsyncpa [#allocation3], 0
    %s11 = scalar_lea.sflag [#allocation3], 1
    %12 = vsyncpa %s11, 0
    %13 = vsyncpa [#allocation6], 0
    %s14 = scalar_lea.sflag [#allocation6], 1
    %15 = vsyncpa %s14, 0
    %16 = vsyncpa [#allocation9], 0
    %17 = vsyncpa [#allocation4], 0
    %s18 = scalar_lea.sflag [#allocation4], 1
    %19 = vsyncpa %s18, 0
    loop: start=0, step=1, limit=4
    $region2: #{tpu_custom_call.1} parent=1 // loop_pre_header
      _
    $region3: #{tpu_custom_call.1} parent=1 // loop_header
      %s21 = sphi 0, %s25
      %p22 = scmp.ge.s32.totalorder %s21, 4
      %s31 = sphi 0, %s33
      %s34 = sphi 0, %s31
      %s35 = sphi 0, %s34
      %s51 = sphi 0, %s35
      %s57 = sphi 0, %s59
      %s60 = sphi 0, %s57
      %s61 = sphi 0, %s60
      %s77 = sphi 0, %s61
      %s83 = sphi 0, %s85
      %s86 = sphi 0, %s83
      %s87 = sphi 0, %s86
      %s103 = sphi 0, %s87
      %s107 = sphi 0, %s107
      %s109 = sphi 0, %s107
      %s110 = sphi 0, %s109
      %s124 = sphi 0, %s110
      %s128 = sphi 0, %s128
      %s130 = sphi 0, %s128
      %s131 = sphi 0, %s130
      %s145 = sphi 0, %s131
      %s151 = sphi 0, %s153
      %s154 = sphi 0, %s151
      %s155 = sphi 0, %s154
      %s171 = sphi 0, %s155
    $region4: #{tpu_custom_call.1} parent=1 // loop_header_branch
      %24 = sbr.rel (%p22) target = $region8
    $region5: #{tpu_custom_call.1} parent=1 // loop_body
      %s26 = ssub.s32 %s21, 1
      %s27 = ssub.s32 %s21, 2
      %s28 = sadd.s32 %s21, 1
      %s29 = ssub.s32 %s21, %s28
      %p30 = scmp.eq.s32.totalorder %s29, 0
      %s32 = sadd.s32 %s31, 1
      %s33 = scalar_select %p30, %s31, %s32
      %p36 = pneg %p30
      %p37 = scmp.eq.s32.totalorder %s21, 1
      %p38 = por %p36, %p37
      %p39 = scmp.ne.s32.totalorder %s31, %s34
      %p40 = scmp.eq.s32.totalorder %s21, 0
      %p41 = por %p39, %p40
      %p42 = scmp.ne.s32.totalorder %s31, %s34
      %p43 = scmp.eq.s32.totalorder %s26, 1
      %p44 = por %p42, %p43
      %p45 = scmp.ne.s32.totalorder %s34, %s35
      %p46 = scmp.eq.s32.totalorder %s26, 0
      %p47 = por %p45, %p46
      %p48 = scmp.ne.s32.totalorder %s34, %s35
      %p49 = scmp.eq.s32.totalorder %s27, 1
      %p50 = por %p48, %p49
      %p52 = scmp.ne.s32.totalorder %s35, %s51
      %p53 = scmp.eq.s32.totalorder %s27, 0
      %p54 = por %p52, %p53
      %s55 = ssub.s32 %s21, %s28
      %p56 = scmp.eq.s32.totalorder %s55, 0
      %s58 = sadd.s32 %s57, 1
      %s59 = scalar_select %p56, %s57, %s58
      %p62 = pneg %p56
      %p63 = scmp.eq.s32.totalorder %s21, 1
      %p64 = por %p62, %p63
      %p65 = scmp.ne.s32.totalorder %s57, %s60
      %p66 = scmp.eq.s32.totalorder %s21, 0
      %p67 = por %p65, %p66
      %p68 = scmp.ne.s32.totalorder %s57, %s60
      %p69 = scmp.eq.s32.totalorder %s26, 1
      %p70 = por %p68, %p69
      %p71 = scmp.ne.s32.totalorder %s60, %s61
      %p72 = scmp.eq.s32.totalorder %s26, 0
      %p73 = por %p71, %p72
      %p74 = scmp.ne.s32.totalorder %s60, %s61
      %p75 = scmp.eq.s32.totalorder %s27, 1
      %p76 = por %p74, %p75
      %p78 = scmp.ne.s32.totalorder %s61, %s77
      %p79 = scmp.eq.s32.totalorder %s27, 0
      %p80 = por %p78, %p79
      %s81 = ssub.s32 %s21, %s28
      %p82 = scmp.eq.s32.totalorder %s81, 0
      %s84 = sadd.s32 %s83, 1
      %s85 = scalar_select %p82, %s83, %s84
      %p88 = pneg %p82
      %p89 = scmp.eq.s32.totalorder %s21, 1
      %p90 = por %p88, %p89
      %p91 = scmp.ne.s32.totalorder %s83, %s86
      %p92 = scmp.eq.s32.totalorder %s21, 0
      %p93 = por %p91, %p92
      %p94 = scmp.ne.s32.totalorder %s83, %s86
      %p95 = scmp.eq.s32.totalorder %s26, 1
      %p96 = por %p94, %p95
      %p97 = scmp.ne.s32.totalorder %s86, %s87
      %p98 = scmp.eq.s32.totalorder %s26, 0
      %p99 = por %p97, %p98
      %p100 = scmp.ne.s32.totalorder %s86, %s87
      %p101 = scmp.eq.s32.totalorder %s27, 1
      %p102 = por %p100, %p101
      %p104 = scmp.ne.s32.totalorder %s87, %s103
      %p105 = scmp.eq.s32.totalorder %s27, 0
      %p106 = por %p104, %p105
      %s108 = sadd.s32 %s107, 1
      %p111 = scmp.eq.s32.totalorder %s21, 1
      %p112 = scmp.ne.s32.totalorder %s107, %s109
      %p113 = scmp.eq.s32.totalorder %s21, 0
      %p114 = por %p112, %p113
      %p115 = scmp.ne.s32.totalorder %s107, %s109
      %p116 = scmp.eq.s32.totalorder %s26, 1
      %p117 = por %p115, %p116
      %p118 = scmp.ne.s32.totalorder %s109, %s110
      %p119 = scmp.eq.s32.totalorder %s26, 0
      %p120 = por %p118, %p119
      %p121 = scmp.ne.s32.totalorder %s109, %s110
      %p122 = scmp.eq.s32.totalorder %s27, 1
      %p123 = por %p121, %p122
      %p125 = scmp.ne.s32.totalorder %s110, %s124
      %p126 = scmp.eq.s32.totalorder %s27, 0
      %p127 = por %p125, %p126
      %s129 = sadd.s32 %s128, 1
      %p132 = scmp.eq.s32.totalorder %s21, 1
      %p133 = scmp.ne.s32.totalorder %s128, %s130
      %p134 = scmp.eq.s32.totalorder %s21, 0
      %p135 = por %p133, %p134
      %p136 = scmp.ne.s32.totalorder %s128, %s130
      %p137 = scmp.eq.s32.totalorder %s26, 1
      %p138 = por %p136, %p137
      %p139 = scmp.ne.s32.totalorder %s130, %s131
      %p140 = scmp.eq.s32.totalorder %s26, 0
      %p141 = por %p139, %p140
      %p142 = scmp.ne.s32.totalorder %s130, %s131
      %p143 = scmp.eq.s32.totalorder %s27, 1
      %p144 = por %p142, %p143
      %p146 = scmp.ne.s32.totalorder %s131, %s145
      %p147 = scmp.eq.s32.totalorder %s27, 0
      %p148 = por %p146, %p147
      %s149 = ssub.s32 %s21, %s28
      %p150 = scmp.eq.s32.totalorder %s149, 0
      %s152 = sadd.s32 %s151, 1
      %s153 = scalar_select %p150, %s151, %s152
      %p156 = pneg %p150
      %p157 = scmp.eq.s32.totalorder %s21, 1
      %p158 = por %p156, %p157
      %p159 = scmp.ne.s32.totalorder %s151, %s154
      %p160 = scmp.eq.s32.totalorder %s21, 0
      %p161 = por %p159, %p160
      %p162 = scmp.ne.s32.totalorder %s151, %s154
      %p163 = scmp.eq.s32.totalorder %s26, 1
      %p164 = por %p162, %p163
      %p165 = scmp.ne.s32.totalorder %s154, %s155
      %p166 = scmp.eq.s32.totalorder %s26, 0
      %p167 = por %p165, %p166
      %p168 = scmp.ne.s32.totalorder %s154, %s155
      %p169 = scmp.eq.s32.totalorder %s27, 1
      %p170 = por %p168, %p169
      %p172 = scmp.ne.s32.totalorder %s155, %s171
      %p173 = scmp.eq.s32.totalorder %s27, 0
      %p174 = por %p172, %p173
      %p175 = scmp.le.s32.totalorder 1, %s21
      %p176 = scmp.lt.s32.totalorder %s21, 3
      %p177 = pnand %p175, %p176
      %p178 = pneg %p177
      // Predicated region
      $region9: #{tpu_custom_call.1} parent=5 // pred_check
        _
      $region10: #{tpu_custom_call.1} parent=5 // pred_check_branch
        %180 = sbr.rel (%p177) target = $region12
      $region11: #{tpu_custom_call.1} parent=5 // pred_region
        %s181 = ssub.s32 %s21, 1
        // Predicated region
        $region13: #{tpu_custom_call.1} parent=11 // pred_check
          %p182 = pneg %p120
        $region14: #{tpu_custom_call.1} parent=11 // pred_check_branch
          %184 = sbr.rel (%p182) target = $region16
        $region15: #{tpu_custom_call.1} parent=11 // pred_region
          %s186 = ssub.s32 1024, 1024
          %187 = vsyncadd [#allocation9], %s186
          %s188 = sshll.u32 [#allocation8], 4
          %s189 = int_to_ptr.vmem [resolvable:$true] %s188
          %194 = dma.hbm_to_vmem [thread:$0]  %s3, 1024, %s189, [#allocation9], 128, 128, 8
        $region16: #{tpu_custom_call.1} parent=11 // pred_fallthru
          _
        // Predicated region
        $region17: #{tpu_custom_call.1} parent=11 // pred_check
          %p195 = pneg %p141
        $region18: #{tpu_custom_call.1} parent=11 // pred_check_branch
          %197 = sbr.rel (%p195) target = $region20
        $region19: #{tpu_custom_call.1} parent=11 // pred_region
          %s199 = ssub.s32 1024, 1024
          %200 = vsyncadd [#allocation9], %s199
          %s201 = sshll.u32 [#allocation10], 4
          %s202 = int_to_ptr.vmem [resolvable:$true] %s201
          %207 = dma.hbm_to_vmem [thread:$0]  %s4, 1024, %s202, [#allocation9], 128, 128, 8
        $region20: #{tpu_custom_call.1} parent=11 // pred_fallthru
          _
      $region12: #{tpu_custom_call.1} parent=5 // pred_fallthru
        _
      %p208 = scmp.lt.s32.totalorder %s21, 2
      // Predicated region
      $region21: #{tpu_custom_call.1} parent=5 // pred_check
        %p209 = pneg %p208
      $region22: #{tpu_custom_call.1} parent=5 // pred_check_branch
        %211 = sbr.rel (%p209) target = $region24
      $region23: #{tpu_custom_call.1} parent=5 // pred_region
        // Predicated region
        $region25: #{tpu_custom_call.1} parent=23 // pred_check
          %p212 = pneg %p41
        $region26: #{tpu_custom_call.1} parent=23 // pred_check_branch
          %214 = sbr.rel (%p212) target = $region28
        $region27: #{tpu_custom_call.1} parent=23 // pred_region
          %s215 = sand.u32 %s31, 1
          %s216 = scalar_lea.sflag [#allocation3], %s215
          %s217 = sand.u32 %s31, 1
          %s218 = smul.addr %s217, 8
          %s219 = scalar_lea.vmem [#allocation2], %s218
          %s221 = ssub.s32 128, 128
          %222 = vsyncadd %s216, %s221
          %s223 = smul.addr %s21, 128
          %s224 = scalar_lea.hbm %s0, %s223
          %s226 = sshll.u32 %s219, 4
          %s227 = int_to_ptr.vmem [resolvable:$true] %s226
          %229 = dma.hbm_to_vmem [thread:$0]  %s224, 128, %s227, %s216
        $region28: #{tpu_custom_call.1} parent=23 // pred_fallthru
          _
        // Predicated region
        $region29: #{tpu_custom_call.1} parent=23 // pred_check
          %p230 = pneg %p67
        $region30: #{tpu_custom_call.1} parent=23 // pred_check_branch
          %232 = sbr.rel (%p230) target = $region32
        $region31: #{tpu_custom_call.1} parent=23 // pred_region
          %s233 = sand.u32 %s21, 1
          %s234 = scalar_lea.sflag [#allocation6], %s233
          %s235 = sand.u32 %s57, 1
          %s236 = smul.addr %s235, 8
          %s237 = scalar_lea.vmem [#allocation5], %s236
          %s239 = ssub.s32 128, 128
          %240 = vsyncadd %s234, %s239
          %s241 = smul.addr %s21, 128
          %s242 = scalar_lea.hbm %s1, %s241
          %s244 = sshll.u32 %s237, 4
          %s245 = int_to_ptr.vmem [resolvable:$true] %s244
          %247 = dma.hbm_to_vmem [thread:$0]  %s242, 128, %s245, %s234
        $region32: #{tpu_custom_call.1} parent=23 // pred_fallthru
          _
        // Predicated region
        $region33: #{tpu_custom_call.1} parent=23 // pred_check
          %p248 = pneg %p93
        $region34: #{tpu_custom_call.1} parent=23 // pred_check_branch
          %250 = sbr.rel (%p248) target = $region36
        $region35: #{tpu_custom_call.1} parent=23 // pred_region
          %s251 = sand.u32 %s21, 1
          %s252 = scalar_lea.sflag [#allocation6], %s251
          %s253 = sand.u32 %s83, 1
          %s254 = smul.addr %s253, 8
          %s255 = scalar_lea.vmem [#allocation7], %s254
          %s257 = ssub.s32 128, 128
          %258 = vsyncadd %s252, %s257
          %s259 = smul.addr %s21, 128
          %s260 = scalar_lea.hbm %s2, %s259
          %s262 = sshll.u32 %s255, 4
          %s263 = int_to_ptr.vmem [resolvable:$true] %s262
          %265 = dma.hbm_to_vmem [thread:$0]  %s260, 128, %s263, %s252
        $region36: #{tpu_custom_call.1} parent=23 // pred_fallthru
          _
      $region24: #{tpu_custom_call.1} parent=5 // pred_fallthru
        _
      %p266 = scmp.le.s32.totalorder 1, %s21
      %p267 = scmp.lt.s32.totalorder %s21, 3
      %p268 = pnand %p266, %p267
      %p269 = pneg %p268
      // Predicated region
      $region37: #{tpu_custom_call.1} parent=5 // pred_check
        _
      $region38: #{tpu_custom_call.1} parent=5 // pred_check_branch
        %271 = sbr.rel (%p268) target = $region40
      $region39: #{tpu_custom_call.1} parent=5 // pred_region
        %s272 = ssub.s32 %s21, 1
        %s273 = sand.u32 %s34, 1
        %s274 = scalar_lea.sflag [#allocation3], %s273
        %s275 = sand.u32 %s34, 1
        %s276 = smul.addr %s275, 8
        %s277 = scalar_lea.vmem [#allocation2], %s276
        // Predicated region
        $region41: #{tpu_custom_call.1} parent=39 // pred_check
          %p278 = pneg %p47
        $region42: #{tpu_custom_call.1} parent=39 // pred_check_branch
          %280 = sbr.rel (%p278) target = $region44
        $region43: #{tpu_custom_call.1} parent=39 // pred_region
          %281 = dma.done %s274, 128
        $region44: #{tpu_custom_call.1} parent=39 // pred_fallthru
          _
        %s282 = sand.u32 %s26, 1
        %s283 = scalar_lea.sflag [#allocation6], %s282
        %s284 = sand.u32 %s60, 1
        %s285 = smul.addr %s284, 8
        %s286 = scalar_lea.vmem [#allocation5], %s285
        // Predicated region
        $region45: #{tpu_custom_call.1} parent=39 // pred_check
          %p287 = pneg %p73
        $region46: #{tpu_custom_call.1} parent=39 // pred_check_branch
          %289 = sbr.rel (%p287) target = $region48
        $region47: #{tpu_custom_call.1} parent=39 // pred_region
          %290 = dma.done %s283, 128
        $region48: #{tpu_custom_call.1} parent=39 // pred_fallthru
          _
        %s291 = sand.u32 %s26, 1
        %s292 = scalar_lea.sflag [#allocation6], %s291
        %s293 = sand.u32 %s86, 1
        %s294 = smul.addr %s293, 8
        %s295 = scalar_lea.vmem [#allocation7], %s294
        // Predicated region
        $region49: #{tpu_custom_call.1} parent=39 // pred_check
          %p296 = pneg %p99
        $region50: #{tpu_custom_call.1} parent=39 // pred_check_branch
          %298 = sbr.rel (%p296) target = $region52
        $region51: #{tpu_custom_call.1} parent=39 // pred_region
          %299 = dma.done %s292, 128
        $region52: #{tpu_custom_call.1} parent=39 // pred_fallthru
          _
        // Predicated region
        $region53: #{tpu_custom_call.1} parent=39 // pred_check
          %p300 = pneg %p120
        $region54: #{tpu_custom_call.1} parent=39 // pred_check_branch
          %302 = sbr.rel (%p300) target = $region56
        $region55: #{tpu_custom_call.1} parent=39 // pred_region
          %303 = dma.done [#allocation9], 1024
        $region56: #{tpu_custom_call.1} parent=39 // pred_fallthru
          _
        // Predicated region
        $region57: #{tpu_custom_call.1} parent=39 // pred_check
          %p304 = pneg %p141
        $region58: #{tpu_custom_call.1} parent=39 // pred_check_branch
          %306 = sbr.rel (%p304) target = $region60
        $region59: #{tpu_custom_call.1} parent=39 // pred_region
          %307 = dma.done [#allocation9], 1024
        $region60: #{tpu_custom_call.1} parent=39 // pred_fallthru
          _
        %s308 = sand.u32 %s34, 1
        %s309 = scalar_lea.sflag [#allocation3], %s308
        %s310 = sand.u32 %s34, 1
        %s311 = smul.addr %s310, 8
        %s312 = scalar_lea.vmem [#allocation2], %s311
        %p313 = pneg %p47
        %p314 = pneg %p44
        %s315 = sand.u32 %s26, 1
        %s316 = scalar_lea.sflag [#allocation6], %s315
        %s317 = sand.u32 %s60, 1
        %s318 = smul.addr %s317, 8
        %s319 = scalar_lea.vmem [#allocation5], %s318
        %p320 = pneg %p73
        %p321 = pneg %p70
        %s322 = sand.u32 %s26, 1
        %s323 = scalar_lea.sflag [#allocation6], %s322
        %s324 = sand.u32 %s86, 1
        %s325 = smul.addr %s324, 8
        %s326 = scalar_lea.vmem [#allocation7], %s325
        %p327 = pneg %p99
        %p328 = pneg %p96
        %p329 = pneg %p120
        %p330 = pneg %p117
        %p331 = pneg %p141
        %p332 = pneg %p138
        %p333 = pneg %p167
        %p334 = pneg %p164
        %s335 = sand.u32 %s154, 1
        %s336 = scalar_lea.sflag [#allocation4], %s335
        %s337 = sand.u32 %s154, 1
        %s338 = smul.addr %s337, 8
        %s339 = scalar_lea.vmem [#allocation11], %s338
        %v340 = vld [vmem:[%s277] sm:$0xff]
        %v341 = vld [vmem:[#allocation8] sm:$0xff]
        %v342 = vld [vmem:[#allocation8 + $0x8] sm:$0xff]
        %v343 = vld [vmem:[#allocation8 + $0x10] sm:$0xff]
        %v344 = vld [vmem:[#allocation8 + $0x18] sm:$0xff]
        %v345 = vld [vmem:[#allocation8 + $0x20] sm:$0xff]
        %v346 = vld [vmem:[#allocation8 + $0x28] sm:$0xff]
        %v347 = vld [vmem:[#allocation8 + $0x30] sm:$0xff]
        %v348 = vld [vmem:[#allocation8 + $0x38] sm:$0xff]
        %vm349 = vcmask 523264
        %v351 = vsel %vm349, %v340, 0
        %353 = vmatprep.subr.mxu0 0.0
        %354 = vmatpush1.msra.mxu0 0.0
        %355 = vmatprep.subr.mxu0 0.0
        %356 = vmatpush1.msra.mxu0 0.0
        %357 = vmatprep.subr.mxu0 0.0
        %358 = vmatpush1.msra.mxu0 0.0
        %359 = vmatprep.subr.mxu0 0.0
        %360 = vmatpush1.msra.mxu0 0.0
        %361 = vmatprep.subr.mxu0 0.0
        %362 = vmatpush1.msra.mxu0 0.0
        %363 = vmatprep.subr.mxu0 0.0
        %364 = vmatpush1.msra.mxu0 0.0
        %365 = vmatprep.subr.mxu0 0.0
        %366 = vmatpush1.msra.mxu0 0.0
        %367 = vmatprep.subr.mxu0 0.0
        %368 = vmatpush1.msra.mxu0 0.0
        %369 = vmatprep.subr.mxu0 0.0
        %370 = vmatpush1.msra.mxu0 %v348
        %371 = vmatprep.subr.mxu0 0.0
        %372 = vmatpush1.msra.mxu0 %v347
        %373 = vmatprep.subr.mxu0 0.0
        %374 = vmatpush1.msra.mxu0 %v346
        %375 = vmatprep.subr.mxu0 0.0
        %376 = vmatpush1.msra.mxu0 %v345
        %377 = vmatprep.subr.mxu0 0.0
        %378 = vmatpush1.msra.mxu0 %v344
        %379 = vmatprep.subr.mxu0 0.0
        %380 = vmatpush1.msra.mxu0 %v343
        %381 = vmatprep.subr.mxu0 0.0
        %382 = vmatpush1.msra.mxu0 %v342
        %383 = vmatprep.subr.mxu0 0.0
        %384 = vmatpush1.msra.mxu0 %v341
        %385 = vmatprep.subr.mxu0 0.0
        %386 = vmatpush2.msra.mxu0 0.0
        %387 = vmatprep.subr.mxu0 0.0
        %388 = vmatpush2.msra.mxu0 0.0
        %389 = vmatprep.subr.mxu0 0.0
        %390 = vmatpush2.msra.mxu0 0.0
        %391 = vmatprep.subr.mxu0 0.0
        %392 = vmatpush2.msra.mxu0 0.0
        %393 = vmatprep.subr.mxu0 0.0
        %394 = vmatpush2.msra.mxu0 0.0
        %395 = vmatprep.subr.mxu0 0.0
        %396 = vmatpush2.msra.mxu0 0.0
        %397 = vmatprep.subr.mxu0 0.0
        %398 = vmatpush2.msra.mxu0 0.0
        %399 = vmatprep.subr.mxu0 0.0
        %400 = vmatpush2.msra.mxu0 0.0
        %401 = vmatprep.subr.mxu0 0.0
        %402 = vmatpush2.msra.mxu0 0.0
        %403 = vmatprep.subr.mxu0 0.0
        %404 = vmatpush2.msra.mxu0 0.0
        %405 = vmatprep.subr.mxu0 0.0
        %406 = vmatpush2.msra.mxu0 0.0
        %407 = vmatprep.subr.mxu0 0.0
        %408 = vmatpush2.msra.mxu0 0.0
        %409 = vmatprep.subr.mxu0 0.0
        %410 = vmatpush2.msra.mxu0 0.0
        %411 = vmatprep.subr.mxu0 0.0
        %412 = vmatpush2.msra.mxu0 0.0
        %413 = vmatprep.subr.mxu0 0.0
        %414 = vmatpush2.msra.mxu0 0.0
        %415 = vmatprep.subr.mxu0 0.0
        %416 = vmatpush2.msra.mxu0 0.0
        %417 = vmatprep.mubr.f32.mxu0 0.0
        %418 = vmatmul.mubr.f32.gmra.mxu0 %v351
        %v419 = vpop.f32.mrf.mxu0
        %v420 = vadd.f32 0.0, %v419
        %v421 = vpop.f32.mrf.mxu0
        %422 = vdwg.mxu0
        %v423 = vld [vmem:[%s286] sm:$0xff]
        %v424 = vld [vmem:[%s295] sm:$0xff]
        %v425 = vlaneseq
        %v426 = vshrl.u32 %v425, 7
        %v427 = vadd.s32 %v426, 8
        %vm428 = vcmp.lt.s32.totalorder %v426, 0
        %v429 = vsub.s32 0, %v426
        %v430 = vsel %vm428, %v429, %v426
        %v431 = vshrl.u32 %v430, 3
        %v432 = vand.u32 %v430, 7
        %v433 = vsub.s32 0, %v432
        %v434 = vsel %vm428, %v433, %v432
        %vm435 = vcmp.lt.s32.totalorder %v427, 0
        %v436 = vsub.s32 0, %v427
        %v437 = vsel %vm435, %v436, %v427
        %v438 = vshrl.u32 %v437, 3
        %v439 = vand.u32 %v437, 7
        %v440 = vsub.s32 0, %v439
        %v441 = vsel %vm435, %v440, %v439
        %vm442 = vcmp.ne.s32.totalorder %v434, 0
        %vm443 = vcmp.ne.s32.totalorder %v441, 0
        %vm444 = vcmp.lt.s32.totalorder %v434, 0
        %vm445 = vcmp.lt.s32.totalorder %v441, 0
        %vm446 = vmand %vm444, %vm442
        %vm447 = vmand %vm445, %vm443
        %v448 = vadd.s32 %v434, 8
        %v449 = vadd.s32 %v441, 8
        %v450 = vsel %vm446, %v448, %v434
        %v451 = vsel %vm447, %v449, %v441
        %v452 = vlaneseq
        %v453 = vand.u32 %v452, 127
        %vm454 = vcmp.le.s32.totalorder %v453, %v450
        %vm455 = vcmp.le.s32.totalorder %v453, %v451
        %v456 = vsub.f32 0.0, %v420
        %458 = vrot.lane.b32.xlu0 %v456, 56
        %v459 = vpop.permute.xlu0 %458
        %462 = vrot.lane.b32.xlu0 %v420, 72
        %v463 = vpop.permute.xlu0 %462
        %vm465 = vcmask 64512
        %v466 = vsel %vm465, %v459, %v463
        %468 = vrot.lane.b32.xlu0 %v423, 64
        %v469 = vpop.permute.xlu0 %468
        %v471 = vmul.f32 %v420, %v469
        %v472 = vmul.f32 %v466, %v424
        %474 = vrot.lane.b32.xlu0 %v472, 64
        %v475 = vpop.permute.xlu0 %474
        %v477 = vadd.f32 %v471, %v475
        %478 = vrot.lane.b32.xlu0 %v456, 120
        %v479 = vpop.permute.xlu0 %478
        %481 = vrot.lane.b32.xlu0 %v420, 8
        %v482 = vpop.permute.xlu0 %481
        %v484 = vsel %vm465, %v479, %v482
        %v485 = vmul.f32 %v420, %v423
        %v486 = vmul.f32 %v484, %v424
        %v487 = vadd.f32 %v485, %v486
        %488 = vrot.lane.b32.xlu0 %v456, 104
        %v489 = vpop.permute.xlu0 %488
        %491 = vrot.lane.b32.xlu0 %v420, 120
        %v492 = vpop.permute.xlu0 %491
        %v494 = vsel %vm465, %v489, %v492
        %495 = vrot.lane.b32.xlu0 %v423, 16
        %v496 = vpop.permute.xlu0 %495
        %v498 = vmul.f32 %v420, %v496
        %v499 = vmul.f32 %v494, %v424
        %501 = vrot.lane.b32.xlu0 %v499, 16
        %v502 = vpop.permute.xlu0 %501
        %v504 = vadd.f32 %v498, %v502
        %506 = vrot.lane.b32.xlu0 %v504, 112
        %v507 = vpop.permute.xlu0 %506
        %509 = vrot.lane.b32.xlu0 %v477, 64
        %v510 = vpop.permute.xlu0 %509
        %vm511 = vcmask 130048
        %v513 = vsel %vm511, %v487, 0
        %v515 = vsel %vm511, %v507, 0
        %v517 = vsel %vm511, %v510, 0
        %519 = vmatprep.subr.mxu0 0.0
        %520 = vmatpush1.xpose.msra.mxu0 0.0
        %521 = vmatprep.subr.mxu0 0.0
        %522 = vmatpush1.xpose.msra.mxu0 0.0
        %523 = vmatprep.subr.mxu0 0.0
        %524 = vmatpush1.xpose.msra.mxu0 0.0
        %525 = vmatprep.subr.mxu0 0.0
        %526 = vmatpush1.xpose.msra.mxu0 0.0
        %527 = vmatprep.subr.mxu0 0.0
        %528 = vmatpush1.xpose.msra.mxu0 0.0
        %529 = vmatprep.subr.mxu0 0.0
        %530 = vmatpush1.xpose.msra.mxu0 0.0
        %531 = vmatprep.subr.mxu0 0.0
        %532 = vmatpush1.xpose.msra.mxu0 0.0
        %533 = vmatprep.subr.mxu0 0.0
        %534 = vmatpush1.xpose.msra.mxu0 0.0
        %535 = vmatprep.subr.mxu0 0.0
        %536 = vmatpush1.xpose.msra.mxu0 0.0
        %537 = vmatprep.subr.mxu0 0.0
        %538 = vmatpush1.xpose.msra.mxu0 0.0
        %539 = vmatprep.subr.mxu0 0.0
        %540 = vmatpush1.xpose.msra.mxu0 0.0
        %541 = vmatprep.subr.mxu0 0.0
        %542 = vmatpush1.xpose.msra.mxu0 0.0
        %543 = vmatprep.subr.mxu0 0.0
        %544 = vmatpush1.xpose.msra.mxu0 0.0
        %545 = vmatprep.subr.mxu0 0.0
        %546 = vmatpush1.xpose.msra.mxu0 0.0
        %547 = vmatprep.subr.mxu0 0.0
        %548 = vmatpush1.xpose.msra.mxu0 0.0
        %549 = vmatprep.subr.mxu0 0.0
        %550 = vmatpush1.xpose.msra.mxu0 %v517
        %551 = vmatprep.subr.mxu0 0.0
        %552 = vmatpush2.xpose.msra.mxu0 0.0
        %553 = vmatprep.subr.mxu0 0.0
        %554 = vmatpush2.xpose.msra.mxu0 0.0
        %555 = vmatprep.subr.mxu0 0.0
        %556 = vmatpush2.xpose.msra.mxu0 0.0
        %557 = vmatprep.subr.mxu0 0.0
        %558 = vmatpush2.xpose.msra.mxu0 0.0
        %559 = vmatprep.subr.mxu0 0.0
        %560 = vmatpush2.xpose.msra.mxu0 0.0
        %561 = vmatprep.subr.mxu0 0.0
        %562 = vmatpush2.xpose.msra.mxu0 0.0
        %563 = vmatprep.subr.mxu0 0.0
        %564 = vmatpush2.xpose.msra.mxu0 0.0
        %565 = vmatprep.subr.mxu0 0.0
        %566 = vmatpush2.xpose.msra.mxu0 0.0
        %567 = vmatprep.subr.mxu0 0.0
        %568 = vmatpush2.xpose.msra.mxu0 0.0
        %569 = vmatprep.subr.mxu0 0.0
        %570 = vmatpush2.xpose.msra.mxu0 0.0
        %571 = vmatprep.subr.mxu0 0.0
        %572 = vmatpush2.xpose.msra.mxu0 0.0
        %573 = vmatprep.subr.mxu0 0.0
        %574 = vmatpush2.xpose.msra.mxu0 0.0
        %575 = vmatprep.subr.mxu0 0.0
        %576 = vmatpush2.xpose.msra.mxu0 0.0
        %577 = vmatprep.subr.mxu0 0.0
        %578 = vmatpush2.xpose.msra.mxu0 0.0
        %579 = vmatprep.subr.mxu0 0.0
        %580 = vmatpush2.xpose.msra.mxu0 0.0
        %581 = vmatprep.subr.mxu0 0.0
        %582 = vmatpush2.xpose.msra.mxu0 0.0
        %583 = vmatprep.mubr.f32.mxu0 0.0
        %584 = vmatmul.mubr.f32.gmra.mxu0 %v513
        %v585 = vpop.f32.mrf.mxu0
        %v586 = vadd.f32 0.0, %v585
        %v587 = vpop.f32.mrf.mxu0
        %588 = vmatprep.mubr.f32.mxu0 0.0
        %589 = vmatmul.mubr.f32.gmra.mxu0 %v515
        %v590 = vpop.f32.mrf.mxu0
        %v591 = vadd.f32 0.0, %v590
        %v592 = vpop.f32.mrf.mxu0
        %593 = vdwg.mxu0
        %v594 = vsel %vm454, %v586, -1e+30
        %v595 = vsel %vm455, %v591, -1e+30
        %v596 = vsel %vm465, %v594, -inf
        %597 = vmax.xlane.f32.xlu0 %v596
        %v598 = vpop.xlane.xlu0 %597
        %v599 = vsel %vm465, %v595, -inf
        %600 = vmax.xlane.f32.xlu0 %v599
        %v601 = vpop.xlane.xlu0 %600
        %v602 = vsub.f32 %v594, %v598
        %v603 = vsub.f32 %v595, %v601
        %v604 = vmul.f32 %v602, 1.442695
        %v605 = vpow.pop %v604
        %v606 = vmul.f32 %v603, 1.442695
        %v607 = vpow.pop %v606
        %v608 = vsel %vm465, %v605, 0.0
        %609 = vadd.xlane.f32.xlu0 %v608
        %v610 = vpop.xlane.xlu0 %609
        %v611 = vsel %vm465, %v607, 0.0
        %612 = vadd.xlane.f32.xlu0 %v611
        %v613 = vpop.xlane.xlu0 %612
        %614 = vrot.lane.b32.xlu0 %v420, 32
        %v615 = vpop.permute.xlu0 %614
        %v618 = vsel %vm465, %v605, 0
        %v621 = vsel %vm465, %v607, 0
        %623 = vmatprep.subr.mxu0 0.0
        %624 = vmatpush1.msra.mxu0 0.0
        %625 = vmatprep.subr.mxu0 0.0
        %626 = vmatpush1.msra.mxu0 0.0
        %627 = vmatprep.subr.mxu0 0.0
        %628 = vmatpush1.msra.mxu0 0.0
        %629 = vmatprep.subr.mxu0 0.0
        %630 = vmatpush1.msra.mxu0 0.0
        %631 = vmatprep.subr.mxu0 0.0
        %632 = vmatpush1.msra.mxu0 0.0
        %633 = vmatprep.subr.mxu0 0.0
        %634 = vmatpush1.msra.mxu0 0.0
        %635 = vmatprep.subr.mxu0 0.0
        %636 = vmatpush1.msra.mxu0 0.0
        %637 = vmatprep.subr.mxu0 0.0
        %638 = vmatpush1.msra.mxu0 0.0
        %639 = vmatprep.subr.mxu0 0.0
        %640 = vmatpush1.msra.mxu0 0.0
        %641 = vmatprep.subr.mxu0 0.0
        %642 = vmatpush1.msra.mxu0 0.0
        %643 = vmatprep.subr.mxu0 0.0
        %644 = vmatpush1.msra.mxu0 0.0
        %645 = vmatprep.subr.mxu0 0.0
        %646 = vmatpush1.msra.mxu0 0.0
        %647 = vmatprep.subr.mxu0 0.0
        %648 = vmatpush1.msra.mxu0 0.0
        %649 = vmatprep.subr.mxu0 0.0
        %650 = vmatpush1.msra.mxu0 0.0
        %651 = vmatprep.subr.mxu0 0.0
        %652 = vmatpush1.msra.mxu0 0.0
        %653 = vmatprep.subr.mxu0 0.0
        %654 = vmatpush1.msra.mxu0 %v615
        %655 = vmatprep.subr.mxu0 0.0
        %656 = vmatpush2.msra.mxu0 0.0
        %657 = vmatprep.subr.mxu0 0.0
        %658 = vmatpush2.msra.mxu0 0.0
        %659 = vmatprep.subr.mxu0 0.0
        %660 = vmatpush2.msra.mxu0 0.0
        %661 = vmatprep.subr.mxu0 0.0
        %662 = vmatpush2.msra.mxu0 0.0
        %663 = vmatprep.subr.mxu0 0.0
        %664 = vmatpush2.msra.mxu0 0.0
        %665 = vmatprep.subr.mxu0 0.0
        %666 = vmatpush2.msra.mxu0 0.0
        %667 = vmatprep.subr.mxu0 0.0
        %668 = vmatpush2.msra.mxu0 0.0
        %669 = vmatprep.subr.mxu0 0.0
        %670 = vmatpush2.msra.mxu0 0.0
        %671 = vmatprep.subr.mxu0 0.0
        %672 = vmatpush2.msra.mxu0 0.0
        %673 = vmatprep.subr.mxu0 0.0
        %674 = vmatpush2.msra.mxu0 0.0
        %675 = vmatprep.subr.mxu0 0.0
        %676 = vmatpush2.msra.mxu0 0.0
        %677 = vmatprep.subr.mxu0 0.0
        %678 = vmatpush2.msra.mxu0 0.0
        %679 = vmatprep.subr.mxu0 0.0
        %680 = vmatpush2.msra.mxu0 0.0
        %681 = vmatprep.subr.mxu0 0.0
        %682 = vmatpush2.msra.mxu0 0.0
        %683 = vmatprep.subr.mxu0 0.0
        %684 = vmatpush2.msra.mxu0 0.0
        %685 = vmatprep.subr.mxu0 0.0
        %686 = vmatpush2.msra.mxu0 0.0
        %687 = vmatprep.mubr.f32.mxu0 0.0
        %688 = vmatmul.mubr.f32.gmra.mxu0 %v618
        %v689 = vpop.f32.mrf.mxu0
        %v690 = vadd.f32 0.0, %v689
        %v691 = vpop.f32.mrf.mxu0
        %692 = vmatprep.mubr.f32.mxu0 0.0
        %693 = vmatmul.mubr.f32.gmra.mxu0 %v621
        %v694 = vpop.f32.mrf.mxu0
        %v695 = vadd.f32 0.0, %v694
        %v696 = vpop.f32.mrf.mxu0
        %697 = vdwg.mxu0
        %v698 = vrcp.pop %v610
        %v699 = vmul.f32 %v690, %v698
        %v700 = vrcp.pop %v613
        %v701 = vmul.f32 %v695, %v700
        %v702 = vld [vmem:[#allocation10] sm:$0xff]
        %v703 = vld [vmem:[#allocation10 + $0x8] sm:$0xff]
        %v704 = vld [vmem:[#allocation10 + $0x10] sm:$0xff]
        %v705 = vld [vmem:[#allocation10 + $0x18] sm:$0xff]
        %v707 = vsel %vm511, %v701, 0
        %709 = vmatprep.subr.mxu0 0.0
        %710 = vmatpush1.msra.mxu0 0.0
        %711 = vmatprep.subr.mxu0 0.0
        %712 = vmatpush1.msra.mxu0 0.0
        %713 = vmatprep.subr.mxu0 0.0
        %714 = vmatpush1.msra.mxu0 0.0
        %715 = vmatprep.subr.mxu0 0.0
        %716 = vmatpush1.msra.mxu0 0.0
        %717 = vmatprep.subr.mxu0 0.0
        %718 = vmatpush1.msra.mxu0 0.0
        %719 = vmatprep.subr.mxu0 0.0
        %720 = vmatpush1.msra.mxu0 0.0
        %721 = vmatprep.subr.mxu0 0.0
        %722 = vmatpush1.msra.mxu0 0.0
        %723 = vmatprep.subr.mxu0 0.0
        %724 = vmatpush1.msra.mxu0 0.0
        %725 = vmatprep.subr.mxu0 0.0
        %726 = vmatpush1.msra.mxu0 0.0
        %727 = vmatprep.subr.mxu0 0.0
        %728 = vmatpush1.msra.mxu0 0.0
        %729 = vmatprep.subr.mxu0 0.0
        %730 = vmatpush1.msra.mxu0 0.0
        %731 = vmatprep.subr.mxu0 0.0
        %732 = vmatpush1.msra.mxu0 0.0
        %733 = vmatprep.subr.mxu0 0.0
        %734 = vmatpush1.msra.mxu0 0.0
        %735 = vmatprep.subr.mxu0 0.0
        %736 = vmatpush1.msra.mxu0 0.0
        %737 = vmatprep.subr.mxu0 0.0
        %738 = vmatpush1.msra.mxu0 %v705
        %739 = vmatprep.subr.mxu0 0.0
        %740 = vmatpush1.msra.mxu0 %v704
        %741 = vmatprep.subr.mxu0 0.0
        %742 = vmatpush2.msra.mxu0 0.0
        %743 = vmatprep.subr.mxu0 0.0
        %744 = vmatpush2.msra.mxu0 0.0
        %745 = vmatprep.subr.mxu0 0.0
        %746 = vmatpush2.msra.mxu0 0.0
        %747 = vmatprep.subr.mxu0 0.0
        %748 = vmatpush2.msra.mxu0 0.0
        %749 = vmatprep.subr.mxu0 0.0
        %750 = vmatpush2.msra.mxu0 0.0
        %751 = vmatprep.subr.mxu0 0.0
        %752 = vmatpush2.msra.mxu0 0.0
        %753 = vmatprep.subr.mxu0 0.0
        %754 = vmatpush2.msra.mxu0 0.0
        %755 = vmatprep.subr.mxu0 0.0
        %756 = vmatpush2.msra.mxu0 0.0
        %757 = vmatprep.subr.mxu0 0.0
        %758 = vmatpush2.msra.mxu0 0.0
        %759 = vmatprep.subr.mxu0 0.0
        %760 = vmatpush2.msra.mxu0 0.0
        %761 = vmatprep.subr.mxu0 0.0
        %762 = vmatpush2.msra.mxu0 0.0
        %763 = vmatprep.subr.mxu0 0.0
        %764 = vmatpush2.msra.mxu0 0.0
        %765 = vmatprep.subr.mxu0 0.0
        %766 = vmatpush2.msra.mxu0 0.0
        %767 = vmatprep.subr.mxu0 0.0
        %768 = vmatpush2.msra.mxu0 0.0
        %769 = vmatprep.subr.mxu0 0.0
        %770 = vmatpush2.msra.mxu0 0.0
        %771 = vmatprep.subr.mxu0 0.0
        %772 = vmatpush2.msra.mxu0 0.0
        %773 = vmatprep.mubr.f32.mxu0 0.0
        %774 = vmatmul.mubr.f32.gmra.mxu0 %v707
        %v775 = vpop.f32.mrf.mxu0
        %v776 = vadd.f32 0.0, %v775
        %v777 = vpop.f32.mrf.mxu0
        %778 = vdwg.mxu0
        %v780 = vsel %vm511, %v699, 0
        %782 = vmatprep.subr.mxu0 0.0
        %783 = vmatpush1.msra.mxu0 0.0
        %784 = vmatprep.subr.mxu0 0.0
        %785 = vmatpush1.msra.mxu0 0.0
        %786 = vmatprep.subr.mxu0 0.0
        %787 = vmatpush1.msra.mxu0 0.0
        %788 = vmatprep.subr.mxu0 0.0
        %789 = vmatpush1.msra.mxu0 0.0
        %790 = vmatprep.subr.mxu0 0.0
        %791 = vmatpush1.msra.mxu0 0.0
        %792 = vmatprep.subr.mxu0 0.0
        %793 = vmatpush1.msra.mxu0 0.0
        %794 = vmatprep.subr.mxu0 0.0
        %795 = vmatpush1.msra.mxu0 0.0
        %796 = vmatprep.subr.mxu0 0.0
        %797 = vmatpush1.msra.mxu0 0.0
        %798 = vmatprep.subr.mxu0 0.0
        %799 = vmatpush1.msra.mxu0 0.0
        %800 = vmatprep.subr.mxu0 0.0
        %801 = vmatpush1.msra.mxu0 0.0
        %802 = vmatprep.subr.mxu0 0.0
        %803 = vmatpush1.msra.mxu0 0.0
        %804 = vmatprep.subr.mxu0 0.0
        %805 = vmatpush1.msra.mxu0 0.0
        %806 = vmatprep.subr.mxu0 0.0
        %807 = vmatpush1.msra.mxu0 0.0
        %808 = vmatprep.subr.mxu0 0.0
        %809 = vmatpush1.msra.mxu0 0.0
        %810 = vmatprep.subr.mxu0 0.0
        %811 = vmatpush1.msra.mxu0 %v703
        %812 = vmatprep.subr.mxu0 0.0
        %813 = vmatpush1.msra.mxu0 %v702
        %814 = vmatprep.subr.mxu0 0.0
        %815 = vmatpush2.msra.mxu0 0.0
        %816 = vmatprep.subr.mxu0 0.0
        %817 = vmatpush2.msra.mxu0 0.0
        %818 = vmatprep.subr.mxu0 0.0
        %819 = vmatpush2.msra.mxu0 0.0
        %820 = vmatprep.subr.mxu0 0.0
        %821 = vmatpush2.msra.mxu0 0.0
        %822 = vmatprep.subr.mxu0 0.0
        %823 = vmatpush2.msra.mxu0 0.0
        %824 = vmatprep.subr.mxu0 0.0
        %825 = vmatpush2.msra.mxu0 0.0
        %826 = vmatprep.subr.mxu0 0.0
        %827 = vmatpush2.msra.mxu0 0.0
        %828 = vmatprep.subr.mxu0 0.0
        %829 = vmatpush2.msra.mxu0 0.0
        %830 = vmatprep.subr.mxu0 0.0
        %831 = vmatpush2.msra.mxu0 0.0
        %832 = vmatprep.subr.mxu0 0.0
        %833 = vmatpush2.msra.mxu0 0.0
        %834 = vmatprep.subr.mxu0 0.0
        %835 = vmatpush2.msra.mxu0 0.0
        %836 = vmatprep.subr.mxu0 0.0
        %837 = vmatpush2.msra.mxu0 0.0
        %838 = vmatprep.subr.mxu0 0.0
        %839 = vmatpush2.msra.mxu0 0.0
        %840 = vmatprep.subr.mxu0 0.0
        %841 = vmatpush2.msra.mxu0 0.0
        %842 = vmatprep.subr.mxu0 0.0
        %843 = vmatpush2.msra.mxu0 0.0
        %844 = vmatprep.subr.mxu0 0.0
        %845 = vmatpush2.msra.mxu0 0.0
        %846 = vmatprep.mubr.f32.mxu0 0.0
        %847 = vmatmul.mubr.f32.gmra.mxu0 %v780
        %v848 = vpop.f32.mrf.mxu0
        %v849 = vadd.f32 %v776, %v848
        %v850 = vpop.f32.mrf.mxu0
        %851 = vdwg.mxu0
        %852 = vrot.lane.b32.xlu0 %v456, 40
        %v853 = vpop.permute.xlu0 %852
        %855 = vrot.lane.b32.xlu0 %v420, 56
        %v856 = vpop.permute.xlu0 %855
        %v858 = vsel %vm465, %v853, %v856
        %859 = vrot.lane.b32.xlu0 %v423, 80
        %v860 = vpop.permute.xlu0 %859
        %v862 = vmul.f32 %v420, %v860
        %v863 = vmul.f32 %v858, %v424
        %865 = vrot.lane.b32.xlu0 %v863, 80
        %v866 = vpop.permute.xlu0 %865
        %v868 = vadd.f32 %v862, %v866
        %869 = vrot.lane.b32.xlu0 %v456, 88
        %v870 = vpop.permute.xlu0 %869
        %872 = vrot.lane.b32.xlu0 %v420, 104
        %v873 = vpop.permute.xlu0 %872
        %v875 = vsel %vm465, %v870, %v873
        %876 = vrot.lane.b32.xlu0 %v423, 32
        %v877 = vpop.permute.xlu0 %876
        %v879 = vmul.f32 %v420, %v877
        %v880 = vmul.f32 %v875, %v424
        %882 = vrot.lane.b32.xlu0 %v880, 32
        %v883 = vpop.permute.xlu0 %882
        %v885 = vadd.f32 %v879, %v883
        %886 = vrot.lane.b32.xlu0 %v456, 72
        %v887 = vpop.permute.xlu0 %886
        %889 = vrot.lane.b32.xlu0 %v420, 88
        %v890 = vpop.permute.xlu0 %889
        %v892 = vsel %vm465, %v887, %v890
        %893 = vrot.lane.b32.xlu0 %v423, 48
        %v894 = vpop.permute.xlu0 %893
        %v896 = vmul.f32 %v420, %v894
        %v897 = vmul.f32 %v892, %v424
        %899 = vrot.lane.b32.xlu0 %v897, 48
        %v900 = vpop.permute.xlu0 %899
        %v902 = vadd.f32 %v896, %v900
        %904 = vrot.lane.b32.xlu0 %v902, 112
        %v905 = vpop.permute.xlu0 %904
        %907 = vrot.lane.b32.xlu0 %v885, 96
        %v908 = vpop.permute.xlu0 %907
        %909 = vrot.lane.b32.xlu0 %v905, 96
        %v910 = vpop.permute.xlu0 %909
        %912 = vrot.lane.b32.xlu0 %v868, 48
        %v913 = vpop.permute.xlu0 %912
        %v914 = vsel %vm511, %v908, 0
        %v916 = vsel %vm511, %v910, 0
        %v918 = vsel %vm511, %v913, 0
        %920 = vmatprep.subr.mxu0 0.0
        %921 = vmatpush1.xpose.msra.mxu0 0.0
        %922 = vmatprep.subr.mxu0 0.0
        %923 = vmatpush1.xpose.msra.mxu0 0.0
        %924 = vmatprep.subr.mxu0 0.0
        %925 = vmatpush1.xpose.msra.mxu0 0.0
        %926 = vmatprep.subr.mxu0 0.0
        %927 = vmatpush1.xpose.msra.mxu0 0.0
        %928 = vmatprep.subr.mxu0 0.0
        %929 = vmatpush1.xpose.msra.mxu0 0.0
        %930 = vmatprep.subr.mxu0 0.0
        %931 = vmatpush1.xpose.msra.mxu0 0.0
        %932 = vmatprep.subr.mxu0 0.0
        %933 = vmatpush1.xpose.msra.mxu0 0.0
        %934 = vmatprep.subr.mxu0 0.0
        %935 = vmatpush1.xpose.msra.mxu0 0.0
        %936 = vmatprep.subr.mxu0 0.0
        %937 = vmatpush1.xpose.msra.mxu0 0.0
        %938 = vmatprep.subr.mxu0 0.0
        %939 = vmatpush1.xpose.msra.mxu0 0.0
        %940 = vmatprep.subr.mxu0 0.0
        %941 = vmatpush1.xpose.msra.mxu0 0.0
        %942 = vmatprep.subr.mxu0 0.0
        %943 = vmatpush1.xpose.msra.mxu0 0.0
        %944 = vmatprep.subr.mxu0 0.0
        %945 = vmatpush1.xpose.msra.mxu0 0.0
        %946 = vmatprep.subr.mxu0 0.0
        %947 = vmatpush1.xpose.msra.mxu0 0.0
        %948 = vmatprep.subr.mxu0 0.0
        %949 = vmatpush1.xpose.msra.mxu0 0.0
        %950 = vmatprep.subr.mxu0 0.0
        %951 = vmatpush1.xpose.msra.mxu0 %v918
        %952 = vmatprep.subr.mxu0 0.0
        %953 = vmatpush2.xpose.msra.mxu0 0.0
        %954 = vmatprep.subr.mxu0 0.0
        %955 = vmatpush2.xpose.msra.mxu0 0.0
        %956 = vmatprep.subr.mxu0 0.0
        %957 = vmatpush2.xpose.msra.mxu0 0.0
        %958 = vmatprep.subr.mxu0 0.0
        %959 = vmatpush2.xpose.msra.mxu0 0.0
        %960 = vmatprep.subr.mxu0 0.0
        %961 = vmatpush2.xpose.msra.mxu0 0.0
        %962 = vmatprep.subr.mxu0 0.0
        %963 = vmatpush2.xpose.msra.mxu0 0.0
        %964 = vmatprep.subr.mxu0 0.0
        %965 = vmatpush2.xpose.msra.mxu0 0.0
        %966 = vmatprep.subr.mxu0 0.0
        %967 = vmatpush2.xpose.msra.mxu0 0.0
        %968 = vmatprep.subr.mxu0 0.0
        %969 = vmatpush2.xpose.msra.mxu0 0.0
        %970 = vmatprep.subr.mxu0 0.0
        %971 = vmatpush2.xpose.msra.mxu0 0.0
        %972 = vmatprep.subr.mxu0 0.0
        %973 = vmatpush2.xpose.msra.mxu0 0.0
        %974 = vmatprep.subr.mxu0 0.0
        %975 = vmatpush2.xpose.msra.mxu0 0.0
        %976 = vmatprep.subr.mxu0 0.0
        %977 = vmatpush2.xpose.msra.mxu0 0.0
        %978 = vmatprep.subr.mxu0 0.0
        %979 = vmatpush2.xpose.msra.mxu0 0.0
        %980 = vmatprep.subr.mxu0 0.0
        %981 = vmatpush2.xpose.msra.mxu0 0.0
        %982 = vmatprep.subr.mxu0 0.0
        %983 = vmatpush2.xpose.msra.mxu0 0.0
        %984 = vmatprep.mubr.f32.mxu0 0.0
        %985 = vmatmul.mubr.f32.gmra.mxu0 %v914
        %v986 = vpop.f32.mrf.mxu0
        %v987 = vadd.f32 0.0, %v986
        %v988 = vpop.f32.mrf.mxu0
        %989 = vmatprep.mubr.f32.mxu0 0.0
        %990 = vmatmul.mubr.f32.gmra.mxu0 %v916
        %v991 = vpop.f32.mrf.mxu0
        %v992 = vadd.f32 0.0, %v991
        %v993 = vpop.f32.mrf.mxu0
        %994 = vdwg.mxu0
        %v995 = vsel %vm454, %v987, -1e+30
        %v996 = vsel %vm455, %v992, -1e+30
        %v997 = vsel %vm465, %v995, -inf
        %998 = vmax.xlane.f32.xlu0 %v997
        %v999 = vpop.xlane.xlu0 %998
        %v1000 = vsel %vm465, %v996, -inf
        %1001 = vmax.xlane.f32.xlu0 %v1000
        %v1002 = vpop.xlane.xlu0 %1001
        %v1003 = vsub.f32 %v995, %v999
        %v1004 = vsub.f32 %v996, %v1002
        %v1005 = vmul.f32 %v1003, 1.442695
        %v1006 = vpow.pop %v1005
        %v1007 = vmul.f32 %v1004, 1.442695
        %v1008 = vpow.pop %v1007
        %v1009 = vsel %vm465, %v1006, 0.0
        %1010 = vadd.xlane.f32.xlu0 %v1009
        %v1011 = vpop.xlane.xlu0 %1010
        %v1012 = vsel %vm465, %v1008, 0.0
        %1013 = vadd.xlane.f32.xlu0 %v1012
        %v1014 = vpop.xlane.xlu0 %1013
        %1015 = vrot.lane.b32.xlu0 %v420, 16
        %v1016 = vpop.permute.xlu0 %1015
        %v1019 = vsel %vm465, %v1006, 0
        %v1022 = vsel %vm465, %v1008, 0
        %1024 = vmatprep.subr.mxu0 0.0
        %1025 = vmatpush1.msra.mxu0 0.0
        %1026 = vmatprep.subr.mxu0 0.0
        %1027 = vmatpush1.msra.mxu0 0.0
        %1028 = vmatprep.subr.mxu0 0.0
        %1029 = vmatpush1.msra.mxu0 0.0
        %1030 = vmatprep.subr.mxu0 0.0
        %1031 = vmatpush1.msra.mxu0 0.0
        %1032 = vmatprep.subr.mxu0 0.0
        %1033 = vmatpush1.msra.mxu0 0.0
        %1034 = vmatprep.subr.mxu0 0.0
        %1035 = vmatpush1.msra.mxu0 0.0
        %1036 = vmatprep.subr.mxu0 0.0
        %1037 = vmatpush1.msra.mxu0 0.0
        %1038 = vmatprep.subr.mxu0 0.0
        %1039 = vmatpush1.msra.mxu0 0.0
        %1040 = vmatprep.subr.mxu0 0.0
        %1041 = vmatpush1.msra.mxu0 0.0
        %1042 = vmatprep.subr.mxu0 0.0
        %1043 = vmatpush1.msra.mxu0 0.0
        %1044 = vmatprep.subr.mxu0 0.0
        %1045 = vmatpush1.msra.mxu0 0.0
        %1046 = vmatprep.subr.mxu0 0.0
        %1047 = vmatpush1.msra.mxu0 0.0
        %1048 = vmatprep.subr.mxu0 0.0
        %1049 = vmatpush1.msra.mxu0 0.0
        %1050 = vmatprep.subr.mxu0 0.0
        %1051 = vmatpush1.msra.mxu0 0.0
        %1052 = vmatprep.subr.mxu0 0.0
        %1053 = vmatpush1.msra.mxu0 0.0
        %1054 = vmatprep.subr.mxu0 0.0
        %1055 = vmatpush1.msra.mxu0 %v1016
        %1056 = vmatprep.subr.mxu0 0.0
        %1057 = vmatpush2.msra.mxu0 0.0
        %1058 = vmatprep.subr.mxu0 0.0
        %1059 = vmatpush2.msra.mxu0 0.0
        %1060 = vmatprep.subr.mxu0 0.0
        %1061 = vmatpush2.msra.mxu0 0.0
        %1062 = vmatprep.subr.mxu0 0.0
        %1063 = vmatpush2.msra.mxu0 0.0
        %1064 = vmatprep.subr.mxu0 0.0
        %1065 = vmatpush2.msra.mxu0 0.0
        %1066 = vmatprep.subr.mxu0 0.0
        %1067 = vmatpush2.msra.mxu0 0.0
        %1068 = vmatprep.subr.mxu0 0.0
        %1069 = vmatpush2.msra.mxu0 0.0
        %1070 = vmatprep.subr.mxu0 0.0
        %1071 = vmatpush2.msra.mxu0 0.0
        %1072 = vmatprep.subr.mxu0 0.0
        %1073 = vmatpush2.msra.mxu0 0.0
        %1074 = vmatprep.subr.mxu0 0.0
        %1075 = vmatpush2.msra.mxu0 0.0
        %1076 = vmatprep.subr.mxu0 0.0
        %1077 = vmatpush2.msra.mxu0 0.0
        %1078 = vmatprep.subr.mxu0 0.0
        %1079 = vmatpush2.msra.mxu0 0.0
        %1080 = vmatprep.subr.mxu0 0.0
        %1081 = vmatpush2.msra.mxu0 0.0
        %1082 = vmatprep.subr.mxu0 0.0
        %1083 = vmatpush2.msra.mxu0 0.0
        %1084 = vmatprep.subr.mxu0 0.0
        %1085 = vmatpush2.msra.mxu0 0.0
        %1086 = vmatprep.subr.mxu0 0.0
        %1087 = vmatpush2.msra.mxu0 0.0
        %1088 = vmatprep.mubr.f32.mxu0 0.0
        %1089 = vmatmul.mubr.f32.gmra.mxu0 %v1019
        %v1090 = vpop.f32.mrf.mxu0
        %v1091 = vadd.f32 0.0, %v1090
        %v1092 = vpop.f32.mrf.mxu0
        %1093 = vmatprep.mubr.f32.mxu0 0.0
        %1094 = vmatmul.mubr.f32.gmra.mxu0 %v1022
        %v1095 = vpop.f32.mrf.mxu0
        %v1096 = vadd.f32 0.0, %v1095
        %v1097 = vpop.f32.mrf.mxu0
        %1098 = vdwg.mxu0
        %v1099 = vrcp.pop %v1011
        %v1100 = vmul.f32 %v1091, %v1099
        %v1101 = vrcp.pop %v1014
        %v1102 = vmul.f32 %v1096, %v1101
        %v1103 = vld [vmem:[#allocation10 + $0x20] sm:$0xff]
        %v1104 = vld [vmem:[#allocation10 + $0x28] sm:$0xff]
        %v1106 = vsel %vm511, %v1100, 0
        %1108 = vmatprep.subr.mxu0 0.0
        %1109 = vmatpush1.msra.mxu0 0.0
        %1110 = vmatprep.subr.mxu0 0.0
        %1111 = vmatpush1.msra.mxu0 0.0
        %1112 = vmatprep.subr.mxu0 0.0
        %1113 = vmatpush1.msra.mxu0 0.0
        %1114 = vmatprep.subr.mxu0 0.0
        %1115 = vmatpush1.msra.mxu0 0.0
        %1116 = vmatprep.subr.mxu0 0.0
        %1117 = vmatpush1.msra.mxu0 0.0
        %1118 = vmatprep.subr.mxu0 0.0
        %1119 = vmatpush1.msra.mxu0 0.0
        %1120 = vmatprep.subr.mxu0 0.0
        %1121 = vmatpush1.msra.mxu0 0.0
        %1122 = vmatprep.subr.mxu0 0.0
        %1123 = vmatpush1.msra.mxu0 0.0
        %1124 = vmatprep.subr.mxu0 0.0
        %1125 = vmatpush1.msra.mxu0 0.0
        %1126 = vmatprep.subr.mxu0 0.0
        %1127 = vmatpush1.msra.mxu0 0.0
        %1128 = vmatprep.subr.mxu0 0.0
        %1129 = vmatpush1.msra.mxu0 0.0
        %1130 = vmatprep.subr.mxu0 0.0
        %1131 = vmatpush1.msra.mxu0 0.0
        %1132 = vmatprep.subr.mxu0 0.0
        %1133 = vmatpush1.msra.mxu0 0.0
        %1134 = vmatprep.subr.mxu0 0.0
        %1135 = vmatpush1.msra.mxu0 0.0
        %1136 = vmatprep.subr.mxu0 0.0
        %1137 = vmatpush1.msra.mxu0 %v1104
        %1138 = vmatprep.subr.mxu0 0.0
        %1139 = vmatpush1.msra.mxu0 %v1103
        %1140 = vmatprep.subr.mxu0 0.0
        %1141 = vmatpush2.msra.mxu0 0.0
        %1142 = vmatprep.subr.mxu0 0.0
        %1143 = vmatpush2.msra.mxu0 0.0
        %1144 = vmatprep.subr.mxu0 0.0
        %1145 = vmatpush2.msra.mxu0 0.0
        %1146 = vmatprep.subr.mxu0 0.0
        %1147 = vmatpush2.msra.mxu0 0.0
        %1148 = vmatprep.subr.mxu0 0.0
        %1149 = vmatpush2.msra.mxu0 0.0
        %1150 = vmatprep.subr.mxu0 0.0
        %1151 = vmatpush2.msra.mxu0 0.0
        %1152 = vmatprep.subr.mxu0 0.0
        %1153 = vmatpush2.msra.mxu0 0.0
        %1154 = vmatprep.subr.mxu0 0.0
        %1155 = vmatpush2.msra.mxu0 0.0
        %1156 = vmatprep.subr.mxu0 0.0
        %1157 = vmatpush2.msra.mxu0 0.0
        %1158 = vmatprep.subr.mxu0 0.0
        %1159 = vmatpush2.msra.mxu0 0.0
        %1160 = vmatprep.subr.mxu0 0.0
        %1161 = vmatpush2.msra.mxu0 0.0
        %1162 = vmatprep.subr.mxu0 0.0
        %1163 = vmatpush2.msra.mxu0 0.0
        %1164 = vmatprep.subr.mxu0 0.0
        %1165 = vmatpush2.msra.mxu0 0.0
        %1166 = vmatprep.subr.mxu0 0.0
        %1167 = vmatpush2.msra.mxu0 0.0
        %1168 = vmatprep.subr.mxu0 0.0
        %1169 = vmatpush2.msra.mxu0 0.0
        %1170 = vmatprep.subr.mxu0 0.0
        %1171 = vmatpush2.msra.mxu0 0.0
        %1172 = vmatprep.mubr.f32.mxu0 0.0
        %1173 = vmatmul.mubr.f32.gmra.mxu0 %v1106
        %v1174 = vpop.f32.mrf.mxu0
        %v1175 = vadd.f32 0.0, %v1174
        %v1176 = vpop.f32.mrf.mxu0
        %1177 = vdwg.mxu0
        %v1178 = vadd.f32 %v849, %v1175
        %v1179 = vld [vmem:[#allocation10 + $0x30] sm:$0xff]
        %v1180 = vld [vmem:[#allocation10 + $0x38] sm:$0xff]
        %v1182 = vsel %vm511, %v1102, 0
        %1184 = vmatprep.subr.mxu0 0.0
        %1185 = vmatpush1.msra.mxu0 0.0
        %1186 = vmatprep.subr.mxu0 0.0
        %1187 = vmatpush1.msra.mxu0 0.0
        %1188 = vmatprep.subr.mxu0 0.0
        %1189 = vmatpush1.msra.mxu0 0.0
        %1190 = vmatprep.subr.mxu0 0.0
        %1191 = vmatpush1.msra.mxu0 0.0
        %1192 = vmatprep.subr.mxu0 0.0
        %1193 = vmatpush1.msra.mxu0 0.0
        %1194 = vmatprep.subr.mxu0 0.0
        %1195 = vmatpush1.msra.mxu0 0.0
        %1196 = vmatprep.subr.mxu0 0.0
        %1197 = vmatpush1.msra.mxu0 0.0
        %1198 = vmatprep.subr.mxu0 0.0
        %1199 = vmatpush1.msra.mxu0 0.0
        %1200 = vmatprep.subr.mxu0 0.0
        %1201 = vmatpush1.msra.mxu0 0.0
        %1202 = vmatprep.subr.mxu0 0.0
        %1203 = vmatpush1.msra.mxu0 0.0
        %1204 = vmatprep.subr.mxu0 0.0
        %1205 = vmatpush1.msra.mxu0 0.0
        %1206 = vmatprep.subr.mxu0 0.0
        %1207 = vmatpush1.msra.mxu0 0.0
        %1208 = vmatprep.subr.mxu0 0.0
        %1209 = vmatpush1.msra.mxu0 0.0
        %1210 = vmatprep.subr.mxu0 0.0
        %1211 = vmatpush1.msra.mxu0 0.0
        %1212 = vmatprep.subr.mxu0 0.0
        %1213 = vmatpush1.msra.mxu0 %v1180
        %1214 = vmatprep.subr.mxu0 0.0
        %1215 = vmatpush1.msra.mxu0 %v1179
        %1216 = vmatprep.subr.mxu0 0.0
        %1217 = vmatpush2.msra.mxu0 0.0
        %1218 = vmatprep.subr.mxu0 0.0
        %1219 = vmatpush2.msra.mxu0 0.0
        %1220 = vmatprep.subr.mxu0 0.0
        %1221 = vmatpush2.msra.mxu0 0.0
        %1222 = vmatprep.subr.mxu0 0.0
        %1223 = vmatpush2.msra.mxu0 0.0
        %1224 = vmatprep.subr.mxu0 0.0
        %1225 = vmatpush2.msra.mxu0 0.0
        %1226 = vmatprep.subr.mxu0 0.0
        %1227 = vmatpush2.msra.mxu0 0.0
        %1228 = vmatprep.subr.mxu0 0.0
        %1229 = vmatpush2.msra.mxu0 0.0
        %1230 = vmatprep.subr.mxu0 0.0
        %1231 = vmatpush2.msra.mxu0 0.0
        %1232 = vmatprep.subr.mxu0 0.0
        %1233 = vmatpush2.msra.mxu0 0.0
        %1234 = vmatprep.subr.mxu0 0.0
        %1235 = vmatpush2.msra.mxu0 0.0
        %1236 = vmatprep.subr.mxu0 0.0
        %1237 = vmatpush2.msra.mxu0 0.0
        %1238 = vmatprep.subr.mxu0 0.0
        %1239 = vmatpush2.msra.mxu0 0.0
        %1240 = vmatprep.subr.mxu0 0.0
        %1241 = vmatpush2.msra.mxu0 0.0
        %1242 = vmatprep.subr.mxu0 0.0
        %1243 = vmatpush2.msra.mxu0 0.0
        %1244 = vmatprep.subr.mxu0 0.0
        %1245 = vmatpush2.msra.mxu0 0.0
        %1246 = vmatprep.subr.mxu0 0.0
        %1247 = vmatpush2.msra.mxu0 0.0
        %1248 = vmatprep.mubr.f32.mxu0 0.0
        %1249 = vmatmul.mubr.f32.gmra.mxu0 %v1182
        %v1250 = vpop.f32.mrf.mxu0
        %v1251 = vadd.f32 0.0, %v1250
        %v1252 = vpop.f32.mrf.mxu0
        %1253 = vdwg.mxu0
        %v1254 = vadd.f32 %v1178, %v1251
        %1255 = vst [vmem:[%s339] sm:$0xff] %v1254
        %s1256 = sand.u32 %s154, 1
        %s1257 = scalar_lea.sflag [#allocation4], %s1256
        %s1258 = sand.u32 %s154, 1
        %s1259 = smul.addr %s1258, 8
        %s1260 = scalar_lea.vmem [#allocation11], %s1259
        // Predicated region
        $region61: #{tpu_custom_call.1} parent=39 // pred_check
          %p1261 = pneg %p164
        $region62: #{tpu_custom_call.1} parent=39 // pred_check_branch
          %1263 = sbr.rel (%p1261) target = $region64
        $region63: #{tpu_custom_call.1} parent=39 // pred_region
          %s1265 = ssub.s32 128, 128
          %1266 = vsyncadd %s1257, %s1265
          %s1267 = smul.addr %s26, 128
          %s1268 = scalar_lea.hbm %s5, %s1267
          %s1270 = sshll.u32 %s1260, 4
          %s1271 = int_to_ptr.vmem [resolvable:$true] %s1270
          %1273 = dma.vmem_to_hbm [thread:$0]  %s1271, 128, %s1268, %s1257
        $region64: #{tpu_custom_call.1} parent=39 // pred_fallthru
          _
      $region40: #{tpu_custom_call.1} parent=5 // pred_fallthru
        _
      %p1274 = scmp.le.s32.totalorder 2, %s21
      // Predicated region
      $region65: #{tpu_custom_call.1} parent=5 // pred_check
        %p1275 = pneg %p1274
      $region66: #{tpu_custom_call.1} parent=5 // pred_check_branch
        %1277 = sbr.rel (%p1275) target = $region68
      $region67: #{tpu_custom_call.1} parent=5 // pred_region
        %s1278 = ssub.s32 %s21, 2
        // Predicated region
        $region69: #{tpu_custom_call.1} parent=67 // pred_check
          %p1279 = pneg %p170
        $region70: #{tpu_custom_call.1} parent=67 // pred_check_branch
          %1281 = sbr.rel (%p1279) target = $region72
        $region71: #{tpu_custom_call.1} parent=67 // pred_region
          %s1282 = sand.u32 %s155, 1
          %s1283 = scalar_lea.sflag [#allocation4], %s1282
          %s1284 = sand.u32 %s155, 1
          %s1285 = smul.addr %s1284, 8
          %s1286 = scalar_lea.vmem [#allocation11], %s1285
          %1287 = dma.done %s1283, 128
        $region72: #{tpu_custom_call.1} parent=67 // pred_fallthru
          _
      $region68: #{tpu_custom_call.1} parent=5 // pred_fallthru
        _
    $region6: #{tpu_custom_call.1} parent=1 // loop_footer
      %s25 = sadd.s32 1, %s21
    $region7: #{tpu_custom_call.1} parent=1 // loop_footer_branch
      %20 = sbr.rel target = $region3
    $region8: #{tpu_custom_call.1} parent=1 // loop_exit
      _
    %1288 = vsyncpa [#allocation3], 1
    %s1289 = scalar_lea.sflag [#allocation3], 1
    %1290 = vsyncpa %s1289, 1
    %1291 = vsyncpa [#allocation6], 1
    %s1292 = scalar_lea.sflag [#allocation6], 1
    %1293 = vsyncpa %s1292, 1
    %1294 = vsyncpa [#allocation9], 1
    %1295 = vsyncpa [#allocation4], 1
    %s1296 = scalar_lea.sflag [#allocation4], 1
    %1297 = vsyncpa %s1296, 1

</llo_original>
